<compile_context>
chip_gen: v5e
topology: v5e:2x2
jax: 0.10.0
libtpu: 0.0.40
codegen_flags: <defaults>
</compile_context>

<pallas_src>
import functools

import jax
import jax.numpy as jnp
from jax.experimental import pallas as pl
from jax.experimental.pallas import tpu as pltpu


# ------------------------------ Pallas kernel --------------------------------

def _srcnn_fused_kernel(x_ref, w1_ref, b1_ref, w2_ref, b2_ref, w3_ref, b3_ref,
                        o_ref, tbuf_ref, *, hw_shape, ksizes):
    """Fused 3-layer SRCNN forward for one batch element.

    x_ref    : (1, C0, H*W)              input, channel-major, spatial flattened
    wN_ref   : (CoutN, khN*kwN*CinN)     stacked (im2col-ordered) weights
    bN_ref   : (CoutN, 1)                biases
    o_ref    : (1, C3, H*W)              output
    tbuf_ref : (Cmax, 3*H*W) VMEM        scratch: [x | x | x] for circular shifts
    """
    H, W = hw_shape
    HW = H * W

    def conv_layer(x, w_ref, b_ref, ksize, apply_relu):
        cin = x.shape[0]
        kh, kw = ksize
        ph, pw = (kh - 1) // 2, (kw - 1) // 2

        # Column index of each flattened position (computed in-kernel, no HBM
        # input) and wrap-fix masks per column offset, hoisted out of the loop.
        col = jax.lax.broadcasted_iota(jnp.int32, (cin, HW), 1) % W
        wrap_mask = {}
        for dj in range(-pw, pw + 1):
            if dj > 0:
                wrap_mask[dj] = col >= (W - dj)
            elif dj < 0:
                wrap_mask[dj] = col < (-dj)

        # Triple copy [x | x | x]: any circular shift by |off| < H*W becomes a
        # single contiguous static-offset read (stores are lane-aligned).
        tbuf_ref[pl.ds(0, cin), pl.ds(0, HW)] = x
        tbuf_ref[pl.ds(0, cin), pl.ds(HW, HW)] = x
        tbuf_ref[pl.ds(0, cin), pl.ds(2 * HW, HW)] = x

        taps = []
        for t in range(kh * kw):
            di = t // kw - ph
            dj = t % kw - pw
            off = di * W + dj
            # main[p] = x[(p + off) mod HW]: the row wrap is already correct;
            # the column wrap bleeds into the neighbouring row, fixed below.
            main = tbuf_ref[pl.ds(0, cin), pl.ds(HW + off, HW)]
            if dj > 0:
                fix = tbuf_ref[pl.ds(0, cin), pl.ds(HW + off - W, HW)]
                tap = jnp.where(wrap_mask[dj], fix, main)
            elif dj < 0:
                fix = tbuf_ref[pl.ds(0, cin), pl.ds(HW + off + W, HW)]
                tap = jnp.where(wrap_mask[dj], fix, main)
            else:
                tap = main
            taps.append(tap)

        w_all = w_ref[...].astype(jnp.float32)              # (cout, kh*kw*cin)
        if cin == 1:
            # VPU outer products (avoids a single-sublane concat / tiny MXU op).
            acc = jnp.zeros((w_all.shape[0], HW), jnp.float32)
            for t, tap in enumerate(taps):
                acc = acc + w_all[:, t:t + 1] * tap
        else:
            # im2col slab in VMEM/vregs -> ONE MXU matmul for the whole layer.
            patches = jnp.concatenate(taps, axis=0)         # (kh*kw*cin, HW)
            acc = jnp.dot(w_all, patches,
                          preferred_element_type=jnp.float32)  # (cout, HW)

        acc = acc + b_ref[...].astype(jnp.float32)          # (cout,1) broadcast
        if apply_relu:
            acc = jnp.maximum(acc, 0.0)
        return acc

    x0 = x_ref[0].astype(jnp.float32)                       # (C0, HW)
    a1 = conv_layer(x0, w1_ref, b1_ref, ksizes[0], apply_relu=True)
    a2 = conv_layer(a1, w2_ref, b2_ref, ksizes[1], apply_relu=True)
    a3 = conv_layer(a2, w3_ref, b3_ref, ksizes[2], apply_relu=False)
    o_ref[0] = a3.astype(o_ref.dtype)


# ------------------------------ host-side wrapper -----------------------------

def srcnn_pallas_forward(x_nchw, kernel_params, kernel_sizes, strides):
    """kernel_params: [(w_stacked (cout, kh*kw*cin), b (cout, 1)), ...] x 3."""
    n, c0, h, w = x_nchw.shape
    hw = h * w
    for (kh, kw), (sh, sw) in zip(kernel_sizes, strides):
        assert (kh % 2 != 0 and kw % 2 != 0 and (w - kw) % sw == 0
                and (h - kh) % sh == 0), (
            "kernel_size should be odd, (dim-kernel_size) divisible by stride")
        # TODO(synk): stride > 1 (spatial downsampling) is not supported by the
        # fused kernel; it would need a strided output layout.
        assert (sh, sw) == (1, 1), "fused SRCNN kernel supports stride=1 only"

    c_out = int(kernel_params[-1][0].shape[0])
    cins = [int(wt.shape[1]) // (kh * kw)
            for (wt, _), (kh, kw) in zip(kernel_params, kernel_sizes)]
    c_max = max(cins)

    x_flat = x_nchw.reshape(n, c0, hw)                      # NCHW is already C-major

    flops = 2 * n * hw * sum(int(wt.size) for wt, _ in kernel_params)
    bytes_accessed = 4 * int(x_flat.size + n * c_out * hw
                             + sum(wt.size + b.size for wt, b in kernel_params))

    in_specs = [pl.BlockSpec((1, c0, hw), lambda i: (i, 0, 0))]
    args = [x_flat]
    for wt, b in kernel_params:
        in_specs.append(pl.BlockSpec(tuple(wt.shape), lambda i: (0, 0)))
        in_specs.append(pl.BlockSpec(tuple(b.shape), lambda i: (0, 0)))
        args.extend([wt, b])

    kernel = functools.partial(
        _srcnn_fused_kernel, hw_shape=(h, w),
        ksizes=tuple(tuple(k) for k in kernel_sizes))

    out = pl.pallas_call(
        kernel,
        out_shape=jax.ShapeDtypeStruct((n, c_out, hw), x_nchw.dtype),
        grid_spec=pltpu.PrefetchScalarGridSpec(
            num_scalar_prefetch=0,
            grid=(n,),
            in_specs=in_specs,
            out_specs=pl.BlockSpec((1, c_out, hw), lambda i: (i, 0, 0)),
            scratch_shapes=[pltpu.VMEM((c_max, 3 * hw), jnp.float32)],
        ),
        compiler_params=pltpu.CompilerParams(
            dimension_semantics=("parallel",)),
        cost_estimate=pl.CostEstimate(flops=flops, transcendentals=0,
                                      bytes_accessed=bytes_accessed),
    )(*args)
    return out.reshape(n, c_out, h, w)


# ------------------------------ SRCNN model -----------------------------------

class SRCNNPallas:
    """Mirrors SRCNN(img_channel, c_expand, kernel_sizes, strides)."""

    def __init__(self, img_channel=1, c_expand=64, kernel_sizes=(), strides=(),
                 key=None, dtype=jnp.float32):
        c = img_channel
        dw = c * c_expand
        chans = [(c, dw), (dw, dw // 2), (dw // 2, c)]
        self.kernel_sizes = [tuple(k) for k in kernel_sizes]
        self.strides = [tuple(s) for s in strides]
        keys = jax.random.split(key, 2 * len(chans))
        self.params = []          # (w_hwio, b) for the pure-JAX reference path
        self.kernel_params = []   # (w_stacked, b_col) for the fused Pallas path
        for li, ((cin, cout), (kh, kw)) in enumerate(zip(chans, self.kernel_sizes)):
            fan_in = cin * kh * kw
            bound = 1.0 / (fan_in ** 0.5)  # nn.Conv2d default init range
            wt = jax.random.uniform(keys[2 * li], (kh, kw, cin, cout), dtype,
                                    -bound, bound)
            b = jax.random.uniform(keys[2 * li + 1], (cout,), dtype,
                                   -bound, bound)
            self.params.append((wt, b))
            # (kh, kw, cin, cout) -> (cout, kh, kw, cin) -> (cout, kh*kw*cin);
            # matches the kernel's im2col row order (tap-major, cin-minor).
            w_stacked = jnp.transpose(wt, (3, 0, 1, 2)).reshape(cout, kh * kw * cin)
            self.kernel_params.append((w_stacked, b.reshape(cout, 1)))

    def __call__(self, x_nchw):
        return srcnn_pallas_forward(x_nchw, self.kernel_params,
                                    self.kernel_sizes, self.strides)


# ------------------------------ reference path --------------------------------

def circular_pad_nhwc(x, kernel_size, stride):
    """Exactly mirrors SRCNNBlock.CircularPadding (torch 'circular' pad)."""
    _, h, w, _ = x.shape
    kh, kw = kernel_size
    sh, sw = stride
    assert (kh % 2 != 0 and kw % 2 != 0 and (w - kw) % sw == 0
            and (h - kh) % sh == 0)
    pw = int((w - 1 - (w - kw) / sw) // 2)
    ph = int((h - 1 - (h - kh) / sh) // 2)
    return jnp.pad(x, ((0, 0), (ph, ph), (pw, pw), (0, 0)), mode="wrap")


def reference_forward(model, x_nchw):
    """Pure-JAX reference (lax conv) for correctness check."""
    x = jnp.transpose(x_nchw, (0, 2, 3, 1))
    for i, (wt, b) in enumerate(model.params):
        x = circular_pad_nhwc(x, model.kernel_sizes[i], model.strides[i])
        x = jax.lax.conv_general_dilated(
            x, wt, window_strides=model.strides[i], padding="VALID",
            dimension_numbers=("NHWC", "HWIO", "NHWC"))
        x = x + b
        if i < 2:
            x = jnp.maximum(x, 0.0)
    return jnp.transpose(x, (0, 3, 1, 2))


# ----------------------------------- main --------------------------------------

if __name__ == "__main__":
    key = jax.random.PRNGKey(0)
    k_x, k_p = jax.random.split(key)

    kernel_sizes = [(3, 3), (3, 3), (3, 3)]
    strides = [(1, 1), (1, 1), (1, 1)]
    model = SRCNNPallas(img_channel=1, c_expand=16,
                        kernel_sizes=kernel_sizes, strides=strides, key=k_p)

    x = jax.random.normal(k_x, (2, 1, 16, 16), jnp.float32)   # NCHW like torch

    out = jax.block_until_ready(model(x))
    ref = reference_forward(model, x)

    assert out.shape == (2, 1, 16, 16), out.shape
    assert jnp.allclose(out, ref, atol=1e-4, rtol=1e-4), "Pallas vs reference mismatch"
    print("KERNEL_OK")
</pallas_src>

<mosaic_0001>
module attributes {stable_mosaic.version = 11 : i64} {
  func.func @_srcnn_fused_kernel(%arg0: i32, %arg1: memref<1x1x256xf32, #tpu.memory_space<vmem>>, %arg2: memref<16x9xf32, #tpu.memory_space<vmem>>, %arg3: memref<16x1xf32, #tpu.memory_space<vmem>>, %arg4: memref<8x144xf32, #tpu.memory_space<vmem>>, %arg5: memref<8x1xf32, #tpu.memory_space<vmem>>, %arg6: memref<1x72xf32, #tpu.memory_space<vmem>>, %arg7: memref<1x1xf32, #tpu.memory_space<vmem>>, %arg8: memref<1x1x256xf32, #tpu.memory_space<vmem>>, %arg9: memref<16x768xf32, #tpu.memory_space<vmem>>) attributes {dimension_semantics = [#tpu.dimension_semantics<parallel>], iteration_bounds = array<i64: 2>, scalar_prefetch = 0 : i64, scratch_operands = 1 : i64, tpu.core_type = #tpu.core_type<tc>, window_params = [{transform_indices = @transform_0, window_bounds = array<i64: 1, 1, 256>}, {pipeline_mode = #tpu.pipeline_mode<synchronous>, transform_indices = @transform_1, window_bounds = array<i64: 16, 9>}, {pipeline_mode = #tpu.pipeline_mode<synchronous>, transform_indices = @transform_2, window_bounds = array<i64: 16, 1>}, {pipeline_mode = #tpu.pipeline_mode<synchronous>, transform_indices = @transform_3, window_bounds = array<i64: 8, 144>}, {pipeline_mode = #tpu.pipeline_mode<synchronous>, transform_indices = @transform_4, window_bounds = array<i64: 8, 1>}, {pipeline_mode = #tpu.pipeline_mode<synchronous>, transform_indices = @transform_5, window_bounds = array<i64: 1, 72>}, {pipeline_mode = #tpu.pipeline_mode<synchronous>, transform_indices = @transform_6, window_bounds = array<i64: 1, 1>}, {transform_indices = @transform_7, window_bounds = array<i64: 1, 1, 256>}]} {
    %c0 = arith.constant 0 : index
    %c0_0 = arith.constant 0 : index
    %c0_1 = arith.constant 0 : index
    %0 = vector.load %arg1[%c0, %c0_0, %c0_1] : memref<1x1x256xf32, #tpu.memory_space<vmem>>, vector<1x1x256xf32>
    %1 = vector.shape_cast %0 : vector<1x1x256xf32> to vector<1x256xf32>
    %2 = tpu.iota {dimensions = array<i32: 1>} : vector<1x256xi32>
    %c16_i32 = arith.constant 16 : i32
    %c0_i32 = arith.constant 0 : i32
    %3 = arith.cmpi eq, %c16_i32, %c0_i32 : i32
    %c1_i32 = arith.constant 1 : i32
    %4 = arith.select %3, %c1_i32, %c16_i32 : i32
    %5 = vector.broadcast %4 : i32 to vector<1x256xi32>
    %6 = arith.remsi %2, %5 : vector<1x256xi32>
    %c0_i32_2 = arith.constant 0 : i32
    %7 = vector.broadcast %c0_i32_2 : i32 to vector<1x256xi32>
    %8 = arith.cmpi ne, %6, %7 : vector<1x256xi32>
    %c0_i32_3 = arith.constant 0 : i32
    %9 = vector.broadcast %c0_i32_3 : i32 to vector<1x256xi32>
    %10 = arith.cmpi slt, %6, %9 : vector<1x256xi32>
    %c0_i32_4 = arith.constant 0 : i32
    %11 = arith.cmpi slt, %4, %c0_i32_4 : i32
    %12 = vector.broadcast %11 : i1 to vector<1x256xi1>
    %13 = vector.broadcast %12 : vector<1x256xi1> to vector<1x256xi1>
    %14 = arith.xori %10, %13 : vector<1x256xi1>
    %15 = arith.andi %14, %8 : vector<1x256xi1>
    %16 = vector.broadcast %4 : i32 to vector<1x256xi32>
    %17 = arith.addi %6, %16 : vector<1x256xi32>
    %18 = arith.select %15, %17, %6 : vector<1x256xi1>, vector<1x256xi32>
    %c1_i32_5 = arith.constant 1 : i32
    %19 = vector.broadcast %c1_i32_5 : i32 to vector<1x256xi32>
    %20 = arith.cmpi slt, %18, %19 : vector<1x256xi32>
    %c15_i32 = arith.constant 15 : i32
    %21 = vector.broadcast %c15_i32 : i32 to vector<1x256xi32>
    %22 = arith.cmpi sge, %18, %21 : vector<1x256xi32>
    %c0_6 = arith.constant 0 : index
    %c0_7 = arith.constant 0 : index
    %23 = vector.load %arg9[%c0_6, %c0_7] : memref<16x768xf32, #tpu.memory_space<vmem>>, vector<1x256xf32>
    tpu.vector_store %arg9[%c0_6, %c0_7], %1 {strides = array<i32>} : memref<16x768xf32, #tpu.memory_space<vmem>>, vector<1x256xf32>,
    %c0_8 = arith.constant 0 : index
    %c256 = arith.constant 256 : index
    %24 = vector.load %arg9[%c0_8, %c256] : memref<16x768xf32, #tpu.memory_space<vmem>>, vector<1x256xf32>
    tpu.vector_store %arg9[%c0_8, %c256], %1 {strides = array<i32>} : memref<16x768xf32, #tpu.memory_space<vmem>>, vector<1x256xf32>,
    %c0_9 = arith.constant 0 : index
    %c512 = arith.constant 512 : index
    %25 = vector.load %arg9[%c0_9, %c512] : memref<16x768xf32, #tpu.memory_space<vmem>>, vector<1x256xf32>
    tpu.vector_store %arg9[%c0_9, %c512], %1 {strides = array<i32>} : memref<16x768xf32, #tpu.memory_space<vmem>>, vector<1x256xf32>,
    %c0_10 = arith.constant 0 : index
    %c239 = arith.constant 239 : index
    %26 = vector.load %arg9[%c0_10, %c239] : memref<16x768xf32, #tpu.memory_space<vmem>>, vector<1x256xf32>
    %c0_11 = arith.constant 0 : index
    %c255 = arith.constant 255 : index
    %27 = vector.load %arg9[%c0_11, %c255] : memref<16x768xf32, #tpu.memory_space<vmem>>, vector<1x256xf32>
    %28 = arith.select %20, %27, %26 : vector<1x256xi1>, vector<1x256xf32>
    %c0_12 = arith.constant 0 : index
    %c240 = arith.constant 240 : index
    %29 = vector.load %arg9[%c0_12, %c240] : memref<16x768xf32, #tpu.memory_space<vmem>>, vector<1x256xf32>
    %c0_13 = arith.constant 0 : index
    %c241 = arith.constant 241 : index
    %30 = vector.load %arg9[%c0_13, %c241] : memref<16x768xf32, #tpu.memory_space<vmem>>, vector<1x256xf32>
    %c0_14 = arith.constant 0 : index
    %c225 = arith.constant 225 : index
    %31 = vector.load %arg9[%c0_14, %c225] : memref<16x768xf32, #tpu.memory_space<vmem>>, vector<1x256xf32>
    %32 = arith.select %22, %31, %30 : vector<1x256xi1>, vector<1x256xf32>
    %c0_15 = arith.constant 0 : index
    %c255_16 = arith.constant 255 : index
    %33 = vector.load %arg9[%c0_15, %c255_16] : memref<16x768xf32, #tpu.memory_space<vmem>>, vector<1x256xf32>
    %c0_17 = arith.constant 0 : index
    %c271 = arith.constant 271 : index
    %34 = vector.load %arg9[%c0_17, %c271] : memref<16x768xf32, #tpu.memory_space<vmem>>, vector<1x256xf32>
    %35 = arith.select %20, %34, %33 : vector<1x256xi1>, vector<1x256xf32>
    %c0_18 = arith.constant 0 : index
    %c256_19 = arith.constant 256 : index
    %36 = vector.load %arg9[%c0_18, %c256_19] : memref<16x768xf32, #tpu.memory_space<vmem>>, vector<1x256xf32>
    %c0_20 = arith.constant 0 : index
    %c257 = arith.constant 257 : index
    %37 = vector.load %arg9[%c0_20, %c257] : memref<16x768xf32, #tpu.memory_space<vmem>>, vector<1x256xf32>
    %c0_21 = arith.constant 0 : index
    %c241_22 = arith.constant 241 : index
    %38 = vector.load %arg9[%c0_21, %c241_22] : memref<16x768xf32, #tpu.memory_space<vmem>>, vector<1x256xf32>
    %39 = arith.select %22, %38, %37 : vector<1x256xi1>, vector<1x256xf32>
    %c0_23 = arith.constant 0 : index
    %c271_24 = arith.constant 271 : index
    %40 = vector.load %arg9[%c0_23, %c271_24] : memref<16x768xf32, #tpu.memory_space<vmem>>, vector<1x256xf32>
    %c0_25 = arith.constant 0 : index
    %c287 = arith.constant 287 : index
    %41 = vector.load %arg9[%c0_25, %c287] : memref<16x768xf32, #tpu.memory_space<vmem>>, vector<1x256xf32>
    %42 = arith.select %20, %41, %40 : vector<1x256xi1>, vector<1x256xf32>
    %c0_26 = arith.constant 0 : index
    %c272 = arith.constant 272 : index
    %43 = vector.load %arg9[%c0_26, %c272] : memref<16x768xf32, #tpu.memory_space<vmem>>, vector<1x256xf32>
    %c0_27 = arith.constant 0 : index
    %c273 = arith.constant 273 : index
    %44 = vector.load %arg9[%c0_27, %c273] : memref<16x768xf32, #tpu.memory_space<vmem>>, vector<1x256xf32>
    %c0_28 = arith.constant 0 : index
    %c257_29 = arith.constant 257 : index
    %45 = vector.load %arg9[%c0_28, %c257_29] : memref<16x768xf32, #tpu.memory_space<vmem>>, vector<1x256xf32>
    %46 = arith.select %22, %45, %44 : vector<1x256xi1>, vector<1x256xf32>
    %c0_30 = arith.constant 0 : index
    %c0_31 = arith.constant 0 : index
    %47 = vector.load %arg2[%c0_30, %c0_31] : memref<16x9xf32, #tpu.memory_space<vmem>>, vector<16x9xf32>
    %cst = arith.constant 0.000000e+00 : f32
    %48 = vector.broadcast %cst : f32 to vector<16x256xf32>
    %49 = vector.extract_strided_slice %47 {offsets = [0, 0], sizes = [16, 1], strides = [1, 1]} : vector<16x9xf32> to vector<16x1xf32>
    %50 = vector.broadcast %49 : vector<16x1xf32> to vector<16x256xf32>
    %51 = vector.broadcast %28 : vector<1x256xf32> to vector<16x256xf32>
    %52 = arith.mulf %50, %51 : vector<16x256xf32>
    %53 = arith.addf %48, %52 : vector<16x256xf32>
    %54 = vector.extract_strided_slice %47 {offsets = [0, 1], sizes = [16, 1], strides = [1, 1]} : vector<16x9xf32> to vector<16x1xf32>
    %55 = vector.broadcast %54 : vector<16x1xf32> to vector<16x256xf32>
    %56 = vector.broadcast %29 : vector<1x256xf32> to vector<16x256xf32>
    %57 = arith.mulf %55, %56 : vector<16x256xf32>
    %58 = arith.addf %53, %57 : vector<16x256xf32>
    %59 = vector.extract_strided_slice %47 {offsets = [0, 2], sizes = [16, 1], strides = [1, 1]} : vector<16x9xf32> to vector<16x1xf32>
    %60 = vector.broadcast %59 : vector<16x1xf32> to vector<16x256xf32>
    %61 = vector.broadcast %32 : vector<1x256xf32> to vector<16x256xf32>
    %62 = arith.mulf %60, %61 : vector<16x256xf32>
    %63 = arith.addf %58, %62 : vector<16x256xf32>
    %64 = vector.extract_strided_slice %47 {offsets = [0, 3], sizes = [16, 1], strides = [1, 1]} : vector<16x9xf32> to vector<16x1xf32>
    %65 = vector.broadcast %64 : vector<16x1xf32> to vector<16x256xf32>
    %66 = vector.broadcast %35 : vector<1x256xf32> to vector<16x256xf32>
    %67 = arith.mulf %65, %66 : vector<16x256xf32>
    %68 = arith.addf %63, %67 : vector<16x256xf32>
    %69 = vector.extract_strided_slice %47 {offsets = [0, 4], sizes = [16, 1], strides = [1, 1]} : vector<16x9xf32> to vector<16x1xf32>
    %70 = vector.broadcast %69 : vector<16x1xf32> to vector<16x256xf32>
    %71 = vector.broadcast %36 : vector<1x256xf32> to vector<16x256xf32>
    %72 = arith.mulf %70, %71 : vector<16x256xf32>
    %73 = arith.addf %68, %72 : vector<16x256xf32>
    %74 = vector.extract_strided_slice %47 {offsets = [0, 5], sizes = [16, 1], strides = [1, 1]} : vector<16x9xf32> to vector<16x1xf32>
    %75 = vector.broadcast %74 : vector<16x1xf32> to vector<16x256xf32>
    %76 = vector.broadcast %39 : vector<1x256xf32> to vector<16x256xf32>
    %77 = arith.mulf %75, %76 : vector<16x256xf32>
    %78 = arith.addf %73, %77 : vector<16x256xf32>
    %79 = vector.extract_strided_slice %47 {offsets = [0, 6], sizes = [16, 1], strides = [1, 1]} : vector<16x9xf32> to vector<16x1xf32>
    %80 = vector.broadcast %79 : vector<16x1xf32> to vector<16x256xf32>
    %81 = vector.broadcast %42 : vector<1x256xf32> to vector<16x256xf32>
    %82 = arith.mulf %80, %81 : vector<16x256xf32>
    %83 = arith.addf %78, %82 : vector<16x256xf32>
    %84 = vector.extract_strided_slice %47 {offsets = [0, 7], sizes = [16, 1], strides = [1, 1]} : vector<16x9xf32> to vector<16x1xf32>
    %85 = vector.broadcast %84 : vector<16x1xf32> to vector<16x256xf32>
    %86 = vector.broadcast %43 : vector<1x256xf32> to vector<16x256xf32>
    %87 = arith.mulf %85, %86 : vector<16x256xf32>
    %88 = arith.addf %83, %87 : vector<16x256xf32>
    %89 = vector.extract_strided_slice %47 {offsets = [0, 8], sizes = [16, 1], strides = [1, 1]} : vector<16x9xf32> to vector<16x1xf32>
    %90 = vector.broadcast %89 : vector<16x1xf32> to vector<16x256xf32>
    %91 = vector.broadcast %46 : vector<1x256xf32> to vector<16x256xf32>
    %92 = arith.mulf %90, %91 : vector<16x256xf32>
    %93 = arith.addf %88, %92 : vector<16x256xf32>
    %c0_32 = arith.constant 0 : index
    %c0_33 = arith.constant 0 : index
    %94 = vector.load %arg3[%c0_32, %c0_33] : memref<16x1xf32, #tpu.memory_space<vmem>>, vector<16x1xf32>
    %95 = vector.broadcast %94 : vector<16x1xf32> to vector<16x256xf32>
    %96 = arith.addf %93, %95 : vector<16x256xf32>
    %cst_34 = arith.constant 0.000000e+00 : f32
    %97 = vector.broadcast %cst_34 : f32 to vector<16x256xf32>
    %98 = arith.maximumf %96, %97 : vector<16x256xf32>
    %99 = tpu.iota {dimensions = array<i32: 1>} : vector<16x256xi32>
    %c16_i32_35 = arith.constant 16 : i32
    %c0_i32_36 = arith.constant 0 : i32
    %100 = arith.cmpi eq, %c16_i32_35, %c0_i32_36 : i32
    %c1_i32_37 = arith.constant 1 : i32
    %101 = arith.select %100, %c1_i32_37, %c16_i32_35 : i32
    %102 = vector.broadcast %101 : i32 to vector<16x256xi32>
    %103 = arith.remsi %99, %102 : vector<16x256xi32>
    %c0_i32_38 = arith.constant 0 : i32
    %104 = vector.broadcast %c0_i32_38 : i32 to vector<16x256xi32>
    %105 = arith.cmpi ne, %103, %104 : vector<16x256xi32>
    %c0_i32_39 = arith.constant 0 : i32
    %106 = vector.broadcast %c0_i32_39 : i32 to vector<16x256xi32>
    %107 = arith.cmpi slt, %103, %106 : vector<16x256xi32>
    %c0_i32_40 = arith.constant 0 : i32
    %108 = arith.cmpi slt, %101, %c0_i32_40 : i32
    %109 = vector.broadcast %108 : i1 to vector<16x256xi1>
    %110 = vector.broadcast %109 : vector<16x256xi1> to vector<16x256xi1>
    %111 = arith.xori %107, %110 : vector<16x256xi1>
    %112 = arith.andi %111, %105 : vector<16x256xi1>
    %113 = vector.broadcast %101 : i32 to vector<16x256xi32>
    %114 = arith.addi %103, %113 : vector<16x256xi32>
    %115 = arith.select %112, %114, %103 : vector<16x256xi1>, vector<16x256xi32>
    %c1_i32_41 = arith.constant 1 : i32
    %116 = vector.broadcast %c1_i32_41 : i32 to vector<16x256xi32>
    %117 = arith.cmpi slt, %115, %116 : vector<16x256xi32>
    %c15_i32_42 = arith.constant 15 : i32
    %118 = vector.broadcast %c15_i32_42 : i32 to vector<16x256xi32>
    %119 = arith.cmpi sge, %115, %118 : vector<16x256xi32>
    %c0_43 = arith.constant 0 : index
    %c0_44 = arith.constant 0 : index
    %120 = vector.load %arg9[%c0_43, %c0_44] : memref<16x768xf32, #tpu.memory_space<vmem>>, vector<16x256xf32>
    tpu.vector_store %arg9[%c0_43, %c0_44], %98 {strides = array<i32>} : memref<16x768xf32, #tpu.memory_space<vmem>>, vector<16x256xf32>,
    %c0_45 = arith.constant 0 : index
    %c256_46 = arith.constant 256 : index
    %121 = vector.load %arg9[%c0_45, %c256_46] : memref<16x768xf32, #tpu.memory_space<vmem>>, vector<16x256xf32>
    tpu.vector_store %arg9[%c0_45, %c256_46], %98 {strides = array<i32>} : memref<16x768xf32, #tpu.memory_space<vmem>>, vector<16x256xf32>,
    %c0_47 = arith.constant 0 : index
    %c512_48 = arith.constant 512 : index
    %122 = vector.load %arg9[%c0_47, %c512_48] : memref<16x768xf32, #tpu.memory_space<vmem>>, vector<16x256xf32>
    tpu.vector_store %arg9[%c0_47, %c512_48], %98 {strides = array<i32>} : memref<16x768xf32, #tpu.memory_space<vmem>>, vector<16x256xf32>,
    %c0_49 = arith.constant 0 : index
    %c239_50 = arith.constant 239 : index
    %123 = vector.load %arg9[%c0_49, %c239_50] : memref<16x768xf32, #tpu.memory_space<vmem>>, vector<16x256xf32>
    %c0_51 = arith.constant 0 : index
    %c255_52 = arith.constant 255 : index
    %124 = vector.load %arg9[%c0_51, %c255_52] : memref<16x768xf32, #tpu.memory_space<vmem>>, vector<16x256xf32>
    %125 = arith.select %117, %124, %123 : vector<16x256xi1>, vector<16x256xf32>
    %c0_53 = arith.constant 0 : index
    %c240_54 = arith.constant 240 : index
    %126 = vector.load %arg9[%c0_53, %c240_54] : memref<16x768xf32, #tpu.memory_space<vmem>>, vector<16x256xf32>
    %c0_55 = arith.constant 0 : index
    %c241_56 = arith.constant 241 : index
    %127 = vector.load %arg9[%c0_55, %c241_56] : memref<16x768xf32, #tpu.memory_space<vmem>>, vector<16x256xf32>
    %c0_57 = arith.constant 0 : index
    %c225_58 = arith.constant 225 : index
    %128 = vector.load %arg9[%c0_57, %c225_58] : memref<16x768xf32, #tpu.memory_space<vmem>>, vector<16x256xf32>
    %129 = arith.select %119, %128, %127 : vector<16x256xi1>, vector<16x256xf32>
    %c0_59 = arith.constant 0 : index
    %c255_60 = arith.constant 255 : index
    %130 = vector.load %arg9[%c0_59, %c255_60] : memref<16x768xf32, #tpu.memory_space<vmem>>, vector<16x256xf32>
    %c0_61 = arith.constant 0 : index
    %c271_62 = arith.constant 271 : index
    %131 = vector.load %arg9[%c0_61, %c271_62] : memref<16x768xf32, #tpu.memory_space<vmem>>, vector<16x256xf32>
    %132 = arith.select %117, %131, %130 : vector<16x256xi1>, vector<16x256xf32>
    %c0_63 = arith.constant 0 : index
    %c256_64 = arith.constant 256 : index
    %133 = vector.load %arg9[%c0_63, %c256_64] : memref<16x768xf32, #tpu.memory_space<vmem>>, vector<16x256xf32>
    %c0_65 = arith.constant 0 : index
    %c257_66 = arith.constant 257 : index
    %134 = vector.load %arg9[%c0_65, %c257_66] : memref<16x768xf32, #tpu.memory_space<vmem>>, vector<16x256xf32>
    %c0_67 = arith.constant 0 : index
    %c241_68 = arith.constant 241 : index
    %135 = vector.load %arg9[%c0_67, %c241_68] : memref<16x768xf32, #tpu.memory_space<vmem>>, vector<16x256xf32>
    %136 = arith.select %119, %135, %134 : vector<16x256xi1>, vector<16x256xf32>
    %c0_69 = arith.constant 0 : index
    %c271_70 = arith.constant 271 : index
    %137 = vector.load %arg9[%c0_69, %c271_70] : memref<16x768xf32, #tpu.memory_space<vmem>>, vector<16x256xf32>
    %c0_71 = arith.constant 0 : index
    %c287_72 = arith.constant 287 : index
    %138 = vector.load %arg9[%c0_71, %c287_72] : memref<16x768xf32, #tpu.memory_space<vmem>>, vector<16x256xf32>
    %139 = arith.select %117, %138, %137 : vector<16x256xi1>, vector<16x256xf32>
    %c0_73 = arith.constant 0 : index
    %c272_74 = arith.constant 272 : index
    %140 = vector.load %arg9[%c0_73, %c272_74] : memref<16x768xf32, #tpu.memory_space<vmem>>, vector<16x256xf32>
    %c0_75 = arith.constant 0 : index
    %c273_76 = arith.constant 273 : index
    %141 = vector.load %arg9[%c0_75, %c273_76] : memref<16x768xf32, #tpu.memory_space<vmem>>, vector<16x256xf32>
    %c0_77 = arith.constant 0 : index
    %c257_78 = arith.constant 257 : index
    %142 = vector.load %arg9[%c0_77, %c257_78] : memref<16x768xf32, #tpu.memory_space<vmem>>, vector<16x256xf32>
    %143 = arith.select %119, %142, %141 : vector<16x256xi1>, vector<16x256xf32>
    %c0_79 = arith.constant 0 : index
    %c0_80 = arith.constant 0 : index
    %144 = vector.load %arg4[%c0_79, %c0_80] : memref<8x144xf32, #tpu.memory_space<vmem>>, vector<8x144xf32>
    %145 = tpu.concatenate %125, %126, %129, %132, %133, %136, %139, %140, %143 in 0 : vector<16x256xf32>, vector<16x256xf32>, vector<16x256xf32>, vector<16x256xf32>, vector<16x256xf32>, vector<16x256xf32>, vector<16x256xf32>, vector<16x256xf32>, vector<16x256xf32> -> vector<144x256xf32>
    %cst_81 = arith.constant dense<0.000000e+00> : vector<8x256xf32>
    %146 = tpu.matmul %144, %145, %cst_81 {dimension_numbers = #tpu.dot_dimension_numbers<[1], [0], [0], [1], [0, 0, 1, 1], [], []>} : vector<8x144xf32>, vector<144x256xf32>, vector<8x256xf32> -> vector<8x256xf32>
    %c0_82 = arith.constant 0 : index
    %c0_83 = arith.constant 0 : index
    %147 = vector.load %arg5[%c0_82, %c0_83] : memref<8x1xf32, #tpu.memory_space<vmem>>, vector<8x1xf32>
    %148 = vector.broadcast %147 : vector<8x1xf32> to vector<8x256xf32>
    %149 = arith.addf %146, %148 : vector<8x256xf32>
    %cst_84 = arith.constant 0.000000e+00 : f32
    %150 = vector.broadcast %cst_84 : f32 to vector<8x256xf32>
    %151 = arith.maximumf %149, %150 : vector<8x256xf32>
    %152 = tpu.iota {dimensions = array<i32: 1>} : vector<8x256xi32>
    %c16_i32_85 = arith.constant 16 : i32
    %c0_i32_86 = arith.constant 0 : i32
    %153 = arith.cmpi eq, %c16_i32_85, %c0_i32_86 : i32
    %c1_i32_87 = arith.constant 1 : i32
    %154 = arith.select %153, %c1_i32_87, %c16_i32_85 : i32
    %155 = vector.broadcast %154 : i32 to vector<8x256xi32>
    %156 = arith.remsi %152, %155 : vector<8x256xi32>
    %c0_i32_88 = arith.constant 0 : i32
    %157 = vector.broadcast %c0_i32_88 : i32 to vector<8x256xi32>
    %158 = arith.cmpi ne, %156, %157 : vector<8x256xi32>
    %c0_i32_89 = arith.constant 0 : i32
    %159 = vector.broadcast %c0_i32_89 : i32 to vector<8x256xi32>
    %160 = arith.cmpi slt, %156, %159 : vector<8x256xi32>
    %c0_i32_90 = arith.constant 0 : i32
    %161 = arith.cmpi slt, %154, %c0_i32_90 : i32
    %162 = vector.broadcast %161 : i1 to vector<8x256xi1>
    %163 = vector.broadcast %162 : vector<8x256xi1> to vector<8x256xi1>
    %164 = arith.xori %160, %163 : vector<8x256xi1>
    %165 = arith.andi %164, %158 : vector<8x256xi1>
    %166 = vector.broadcast %154 : i32 to vector<8x256xi32>
    %167 = arith.addi %156, %166 : vector<8x256xi32>
    %168 = arith.select %165, %167, %156 : vector<8x256xi1>, vector<8x256xi32>
    %c1_i32_91 = arith.constant 1 : i32
    %169 = vector.broadcast %c1_i32_91 : i32 to vector<8x256xi32>
    %170 = arith.cmpi slt, %168, %169 : vector<8x256xi32>
    %c15_i32_92 = arith.constant 15 : i32
    %171 = vector.broadcast %c15_i32_92 : i32 to vector<8x256xi32>
    %172 = arith.cmpi sge, %168, %171 : vector<8x256xi32>
    %c0_93 = arith.constant 0 : index
    %c0_94 = arith.constant 0 : index
    %173 = vector.load %arg9[%c0_93, %c0_94] : memref<16x768xf32, #tpu.memory_space<vmem>>, vector<8x256xf32>
    tpu.vector_store %arg9[%c0_93, %c0_94], %151 {strides = array<i32>} : memref<16x768xf32, #tpu.memory_space<vmem>>, vector<8x256xf32>,
    %c0_95 = arith.constant 0 : index
    %c256_96 = arith.constant 256 : index
    %174 = vector.load %arg9[%c0_95, %c256_96] : memref<16x768xf32, #tpu.memory_space<vmem>>, vector<8x256xf32>
    tpu.vector_store %arg9[%c0_95, %c256_96], %151 {strides = array<i32>} : memref<16x768xf32, #tpu.memory_space<vmem>>, vector<8x256xf32>,
    %c0_97 = arith.constant 0 : index
    %c512_98 = arith.constant 512 : index
    %175 = vector.load %arg9[%c0_97, %c512_98] : memref<16x768xf32, #tpu.memory_space<vmem>>, vector<8x256xf32>
    tpu.vector_store %arg9[%c0_97, %c512_98], %151 {strides = array<i32>} : memref<16x768xf32, #tpu.memory_space<vmem>>, vector<8x256xf32>,
    %c0_99 = arith.constant 0 : index
    %c239_100 = arith.constant 239 : index
    %176 = vector.load %arg9[%c0_99, %c239_100] : memref<16x768xf32, #tpu.memory_space<vmem>>, vector<8x256xf32>
    %c0_101 = arith.constant 0 : index
    %c255_102 = arith.constant 255 : index
    %177 = vector.load %arg9[%c0_101, %c255_102] : memref<16x768xf32, #tpu.memory_space<vmem>>, vector<8x256xf32>
    %178 = arith.select %170, %177, %176 : vector<8x256xi1>, vector<8x256xf32>
    %c0_103 = arith.constant 0 : index
    %c240_104 = arith.constant 240 : index
    %179 = vector.load %arg9[%c0_103, %c240_104] : memref<16x768xf32, #tpu.memory_space<vmem>>, vector<8x256xf32>
    %c0_105 = arith.constant 0 : index
    %c241_106 = arith.constant 241 : index
    %180 = vector.load %arg9[%c0_105, %c241_106] : memref<16x768xf32, #tpu.memory_space<vmem>>, vector<8x256xf32>
    %c0_107 = arith.constant 0 : index
    %c225_108 = arith.constant 225 : index
    %181 = vector.load %arg9[%c0_107, %c225_108] : memref<16x768xf32, #tpu.memory_space<vmem>>, vector<8x256xf32>
    %182 = arith.select %172, %181, %180 : vector<8x256xi1>, vector<8x256xf32>
    %c0_109 = arith.constant 0 : index
    %c255_110 = arith.constant 255 : index
    %183 = vector.load %arg9[%c0_109, %c255_110] : memref<16x768xf32, #tpu.memory_space<vmem>>, vector<8x256xf32>
    %c0_111 = arith.constant 0 : index
    %c271_112 = arith.constant 271 : index
    %184 = vector.load %arg9[%c0_111, %c271_112] : memref<16x768xf32, #tpu.memory_space<vmem>>, vector<8x256xf32>
    %185 = arith.select %170, %184, %183 : vector<8x256xi1>, vector<8x256xf32>
    %c0_113 = arith.constant 0 : index
    %c256_114 = arith.constant 256 : index
    %186 = vector.load %arg9[%c0_113, %c256_114] : memref<16x768xf32, #tpu.memory_space<vmem>>, vector<8x256xf32>
    %c0_115 = arith.constant 0 : index
    %c257_116 = arith.constant 257 : index
    %187 = vector.load %arg9[%c0_115, %c257_116] : memref<16x768xf32, #tpu.memory_space<vmem>>, vector<8x256xf32>
    %c0_117 = arith.constant 0 : index
    %c241_118 = arith.constant 241 : index
    %188 = vector.load %arg9[%c0_117, %c241_118] : memref<16x768xf32, #tpu.memory_space<vmem>>, vector<8x256xf32>
    %189 = arith.select %172, %188, %187 : vector<8x256xi1>, vector<8x256xf32>
    %c0_119 = arith.constant 0 : index
    %c271_120 = arith.constant 271 : index
    %190 = vector.load %arg9[%c0_119, %c271_120] : memref<16x768xf32, #tpu.memory_space<vmem>>, vector<8x256xf32>
    %c0_121 = arith.constant 0 : index
    %c287_122 = arith.constant 287 : index
    %191 = vector.load %arg9[%c0_121, %c287_122] : memref<16x768xf32, #tpu.memory_space<vmem>>, vector<8x256xf32>
    %192 = arith.select %170, %191, %190 : vector<8x256xi1>, vector<8x256xf32>
    %c0_123 = arith.constant 0 : index
    %c272_124 = arith.constant 272 : index
    %193 = vector.load %arg9[%c0_123, %c272_124] : memref<16x768xf32, #tpu.memory_space<vmem>>, vector<8x256xf32>
    %c0_125 = arith.constant 0 : index
    %c273_126 = arith.constant 273 : index
    %194 = vector.load %arg9[%c0_125, %c273_126] : memref<16x768xf32, #tpu.memory_space<vmem>>, vector<8x256xf32>
    %c0_127 = arith.constant 0 : index
    %c257_128 = arith.constant 257 : index
    %195 = vector.load %arg9[%c0_127, %c257_128] : memref<16x768xf32, #tpu.memory_space<vmem>>, vector<8x256xf32>
    %196 = arith.select %172, %195, %194 : vector<8x256xi1>, vector<8x256xf32>
    %c0_129 = arith.constant 0 : index
    %c0_130 = arith.constant 0 : index
    %197 = vector.load %arg6[%c0_129, %c0_130] : memref<1x72xf32, #tpu.memory_space<vmem>>, vector<1x72xf32>
    %198 = tpu.concatenate %178, %179, %182, %185, %186, %189, %192, %193, %196 in 0 : vector<8x256xf32>, vector<8x256xf32>, vector<8x256xf32>, vector<8x256xf32>, vector<8x256xf32>, vector<8x256xf32>, vector<8x256xf32>, vector<8x256xf32>, vector<8x256xf32> -> vector<72x256xf32>
    %cst_131 = arith.constant dense<0.000000e+00> : vector<1x256xf32>
    %199 = tpu.matmul %197, %198, %cst_131 {dimension_numbers = #tpu.dot_dimension_numbers<[1], [0], [0], [1], [0, 0, 1, 1], [], []>} : vector<1x72xf32>, vector<72x256xf32>, vector<1x256xf32> -> vector<1x256xf32>
    %c0_132 = arith.constant 0 : index
    %c0_133 = arith.constant 0 : index
    %200 = vector.load %arg7[%c0_132, %c0_133] : memref<1x1xf32, #tpu.memory_space<vmem>>, vector<1x1xf32>
    %201 = vector.broadcast %200 : vector<1x1xf32> to vector<1x256xf32>
    %202 = arith.addf %199, %201 : vector<1x256xf32>
    %c0_134 = arith.constant 0 : index
    %c0_135 = arith.constant 0 : index
    %c0_136 = arith.constant 0 : index
    %203 = vector.load %arg8[%c0_134, %c0_135, %c0_136] : memref<1x1x256xf32, #tpu.memory_space<vmem>>, vector<1x1x256xf32>
    %204 = vector.shape_cast %203 : vector<1x1x256xf32> to vector<1x256xf32>
    %205 = vector.shape_cast %202 : vector<1x256xf32> to vector<1x1x256xf32>
    tpu.vector_store %arg8[%c0_134, %c0_135, %c0_136], %205 {strides = array<i32>} : memref<1x1x256xf32, #tpu.memory_space<vmem>>, vector<1x1x256xf32>,
    return
  }
  func.func @transform_0(%arg0: i32) -> (i32, i32, i32) {
    %c0_i32 = arith.constant 0 : i32
    %c0_i32_0 = arith.constant 0 : i32
    %c0_i32_1 = arith.constant 0 : i32
    return %arg0, %c0_i32, %c0_i32_0 : i32, i32, i32
  }
  func.func @transform_1(%arg0: i32) -> (i32, i32) {
    %c0_i32 = arith.constant 0 : i32
    %c0_i32_0 = arith.constant 0 : i32
    %c0_i32_1 = arith.constant 0 : i32
    return %c0_i32, %c0_i32_0 : i32, i32
  }
  func.func @transform_2(%arg0: i32) -> (i32, i32) {
    %c0_i32 = arith.constant 0 : i32
    %c0_i32_0 = arith.constant 0 : i32
    %c0_i32_1 = arith.constant 0 : i32
    return %c0_i32, %c0_i32_0 : i32, i32
  }
  func.func @transform_3(%arg0: i32) -> (i32, i32) {
    %c0_i32 = arith.constant 0 : i32
    %c0_i32_0 = arith.constant 0 : i32
    %c0_i32_1 = arith.constant 0 : i32
    return %c0_i32, %c0_i32_0 : i32, i32
  }
  func.func @transform_4(%arg0: i32) -> (i32, i32) {
    %c0_i32 = arith.constant 0 : i32
    %c0_i32_0 = arith.constant 0 : i32
    %c0_i32_1 = arith.constant 0 : i32
    return %c0_i32, %c0_i32_0 : i32, i32
  }
  func.func @transform_5(%arg0: i32) -> (i32, i32) {
    %c0_i32 = arith.constant 0 : i32
    %c0_i32_0 = arith.constant 0 : i32
    %c0_i32_1 = arith.constant 0 : i32
    return %c0_i32, %c0_i32_0 : i32, i32
  }
  func.func @transform_6(%arg0: i32) -> (i32, i32) {
    %c0_i32 = arith.constant 0 : i32
    %c0_i32_0 = arith.constant 0 : i32
    %c0_i32_1 = arith.constant 0 : i32
    return %c0_i32, %c0_i32_0 : i32, i32
  }
  func.func @transform_7(%arg0: i32) -> (i32, i32, i32) {
    %c0_i32 = arith.constant 0 : i32
    %c0_i32_0 = arith.constant 0 : i32
    %c0_i32_1 = arith.constant 0 : i32
    return %arg0, %c0_i32, %c0_i32_0 : i32, i32, i32
  }
}

</mosaic_0001>

<llo_original>
// kernel: tpu_custom_call.1
$region0: #{tpu_custom_call.1}
  #allocation0 [shape = 'u32[]', space=smem, size = 0x4, offset = 0x4, fixed_abs, tag = 'smem constant byte address 0x4 - core index']
  #allocation1 [shape = 'u32[72,128]{1,0:T(1,128)}', space=vmem, size = 0x9000, scoped, tag = 'internal scratch']
  #allocation2 [shape = 'f32[16,768]{1,0:T(8,128)}', space=vmem, size = 0xc000, scoped, tag = 'scratch operand']
  #allocation3 [shape = 'f32[1,1]{1,0:T(1,128)S(1)}', space=vmem, size = 0x200, scoped, tag = 'scoped memory for tpu_custom_call.1']
  %s0 = inlined_call_operand.vmem [shape: f32[2,1,256], index: 0, kind: input, shape index: {}]
  %s1 = inlined_call_operand.vmem [shape: f32[16,9], index: 1, kind: input, shape index: {}]
  %s2 = inlined_call_operand.vmem [shape: f32[16,1], index: 2, kind: input, shape index: {}]
  %s3 = inlined_call_operand.hbm [shape: f32[8,144], index: 3, kind: input, shape index: {}]
  %s4 = inlined_call_operand.vmem [shape: f32[8,1], index: 4, kind: input, shape index: {}]
  %s5 = inlined_call_operand.vmem [shape: f32[1,72], index: 5, kind: input, shape index: {}]
  %s6 = inlined_call_operand.<no memory space> [shape: f32[1,1], index: 6, kind: input, shape index: {}]
  %s7 = inlined_call_operand.hbm [shape: f32[2,1,256], index: 7, kind: output, shape index: {}]
  %s8 = sld [smem:[#allocation0]]
  $region65: #{tpu_custom_call.1} parent=0
    _
  %s10 = ssub.s32 1, %s8
  %s11 = scalar_select 0, %s10, %s8
  %v12 = vstv %s6
  %13 = vst [vmem:[#allocation3] sm:$0x1] %v12
  $region1: #{tpu_custom_call.1} parent=0
    #allocation4 [shape = 'u8[8192]{0}', space=vmem, size = 0x2000, scoped, tag = 'input window, operand 3, single buffered']
    #allocation5 [shape = 's32[2]{0}', space=sflag, size = 0x8, scoped, tag = 'scoped memory for tpu_custom_call.1']
    #allocation6 [shape = 's32[2]{0}', space=sflag, size = 0x8, scoped, tag = 'scoped memory for tpu_custom_call.1']
    #allocation7 [shape = 'u8[2048]{0}', space=vmem, size = 0x800, scoped, tag = 'output window, operand 0']
    %14 = vsyncpa [#allocation5], 0
    %15 = vsyncpa [#allocation6], 0
    %s16 = scalar_lea.sflag [#allocation6], 1
    %17 = vsyncpa %s16, 0
    loop: start=0, step=1, limit=4
    $region2: #{tpu_custom_call.1} parent=1 // loop_pre_header
      _
    $region3: #{tpu_custom_call.1} parent=1 // loop_header
      %s19 = sphi 0, %s23
      %p20 = scmp.ge.s32.totalorder %s19, 4
      %s29 = sphi 0, %s31
      %s32 = sphi 0, %s29
      %s33 = sphi 0, %s32
      %s49 = sphi 0, %s33
      %s53 = sphi 0, %s53
      %s55 = sphi 0, %s53
      %s56 = sphi 0, %s55
      %s70 = sphi 0, %s56
      %s74 = sphi 0, %s74
      %s76 = sphi 0, %s74
      %s77 = sphi 0, %s76
      %s91 = sphi 0, %s77
      %s95 = sphi 0, %s95
      %s97 = sphi 0, %s95
      %s98 = sphi 0, %s97
      %s112 = sphi 0, %s98
      %s116 = sphi 0, %s116
      %s118 = sphi 0, %s116
      %s119 = sphi 0, %s118
      %s133 = sphi 0, %s119
      %s137 = sphi 0, %s137
      %s139 = sphi 0, %s137
      %s140 = sphi 0, %s139
      %s154 = sphi 0, %s140
      %s158 = sphi 0, %s158
      %s160 = sphi 0, %s158
      %s161 = sphi 0, %s160
      %s175 = sphi 0, %s161
      %s181 = sphi 0, %s183
      %s184 = sphi 0, %s181
      %s185 = sphi 0, %s184
      %s201 = sphi 0, %s185
    $region4: #{tpu_custom_call.1} parent=1 // loop_header_branch
      %22 = sbr.rel (%p20) target = $region8
    $region5: #{tpu_custom_call.1} parent=1 // loop_body
      %s24 = ssub.s32 %s19, 1
      %s25 = ssub.s32 %s19, 2
      %s26 = sadd.s32 %s19, 1
      %s27 = ssub.s32 %s19, %s26
      %p28 = scmp.eq.s32.totalorder %s27, 0
      %s30 = sadd.s32 %s29, 1
      %s31 = scalar_select %p28, %s29, %s30
      %p34 = pneg %p28
      %p35 = scmp.eq.s32.totalorder %s19, 1
      %p36 = por %p34, %p35
      %p37 = scmp.ne.s32.totalorder %s29, %s32
      %p38 = scmp.eq.s32.totalorder %s19, 0
      %p39 = por %p37, %p38
      %p40 = scmp.ne.s32.totalorder %s29, %s32
      %p41 = scmp.eq.s32.totalorder %s24, 1
      %p42 = por %p40, %p41
      %p43 = scmp.ne.s32.totalorder %s32, %s33
      %p44 = scmp.eq.s32.totalorder %s24, 0
      %p45 = por %p43, %p44
      %p46 = scmp.ne.s32.totalorder %s32, %s33
      %p47 = scmp.eq.s32.totalorder %s25, 1
      %p48 = por %p46, %p47
      %p50 = scmp.ne.s32.totalorder %s33, %s49
      %p51 = scmp.eq.s32.totalorder %s25, 0
      %p52 = por %p50, %p51
      %s54 = sadd.s32 %s53, 1
      %p57 = scmp.eq.s32.totalorder %s19, 1
      %p58 = scmp.ne.s32.totalorder %s53, %s55
      %p59 = scmp.eq.s32.totalorder %s19, 0
      %p60 = por %p58, %p59
      %p61 = scmp.ne.s32.totalorder %s53, %s55
      %p62 = scmp.eq.s32.totalorder %s24, 1
      %p63 = por %p61, %p62
      %p64 = scmp.ne.s32.totalorder %s55, %s56
      %p65 = scmp.eq.s32.totalorder %s24, 0
      %p66 = por %p64, %p65
      %p67 = scmp.ne.s32.totalorder %s55, %s56
      %p68 = scmp.eq.s32.totalorder %s25, 1
      %p69 = por %p67, %p68
      %p71 = scmp.ne.s32.totalorder %s56, %s70
      %p72 = scmp.eq.s32.totalorder %s25, 0
      %p73 = por %p71, %p72
      %s75 = sadd.s32 %s74, 1
      %p78 = scmp.eq.s32.totalorder %s19, 1
      %p79 = scmp.ne.s32.totalorder %s74, %s76
      %p80 = scmp.eq.s32.totalorder %s19, 0
      %p81 = por %p79, %p80
      %p82 = scmp.ne.s32.totalorder %s74, %s76
      %p83 = scmp.eq.s32.totalorder %s24, 1
      %p84 = por %p82, %p83
      %p85 = scmp.ne.s32.totalorder %s76, %s77
      %p86 = scmp.eq.s32.totalorder %s24, 0
      %p87 = por %p85, %p86
      %p88 = scmp.ne.s32.totalorder %s76, %s77
      %p89 = scmp.eq.s32.totalorder %s25, 1
      %p90 = por %p88, %p89
      %p92 = scmp.ne.s32.totalorder %s77, %s91
      %p93 = scmp.eq.s32.totalorder %s25, 0
      %p94 = por %p92, %p93
      %s96 = sadd.s32 %s95, 1
      %p99 = scmp.eq.s32.totalorder %s19, 1
      %p100 = scmp.ne.s32.totalorder %s95, %s97
      %p101 = scmp.eq.s32.totalorder %s19, 0
      %p102 = por %p100, %p101
      %p103 = scmp.ne.s32.totalorder %s95, %s97
      %p104 = scmp.eq.s32.totalorder %s24, 1
      %p105 = por %p103, %p104
      %p106 = scmp.ne.s32.totalorder %s97, %s98
      %p107 = scmp.eq.s32.totalorder %s24, 0
      %p108 = por %p106, %p107
      %p109 = scmp.ne.s32.totalorder %s97, %s98
      %p110 = scmp.eq.s32.totalorder %s25, 1
      %p111 = por %p109, %p110
      %p113 = scmp.ne.s32.totalorder %s98, %s112
      %p114 = scmp.eq.s32.totalorder %s25, 0
      %p115 = por %p113, %p114
      %s117 = sadd.s32 %s116, 1
      %p120 = scmp.eq.s32.totalorder %s19, 1
      %p121 = scmp.ne.s32.totalorder %s116, %s118
      %p122 = scmp.eq.s32.totalorder %s19, 0
      %p123 = por %p121, %p122
      %p124 = scmp.ne.s32.totalorder %s116, %s118
      %p125 = scmp.eq.s32.totalorder %s24, 1
      %p126 = por %p124, %p125
      %p127 = scmp.ne.s32.totalorder %s118, %s119
      %p128 = scmp.eq.s32.totalorder %s24, 0
      %p129 = por %p127, %p128
      %p130 = scmp.ne.s32.totalorder %s118, %s119
      %p131 = scmp.eq.s32.totalorder %s25, 1
      %p132 = por %p130, %p131
      %p134 = scmp.ne.s32.totalorder %s119, %s133
      %p135 = scmp.eq.s32.totalorder %s25, 0
      %p136 = por %p134, %p135
      %s138 = sadd.s32 %s137, 1
      %p141 = scmp.eq.s32.totalorder %s19, 1
      %p142 = scmp.ne.s32.totalorder %s137, %s139
      %p143 = scmp.eq.s32.totalorder %s19, 0
      %p144 = por %p142, %p143
      %p145 = scmp.ne.s32.totalorder %s137, %s139
      %p146 = scmp.eq.s32.totalorder %s24, 1
      %p147 = por %p145, %p146
      %p148 = scmp.ne.s32.totalorder %s139, %s140
      %p149 = scmp.eq.s32.totalorder %s24, 0
      %p150 = por %p148, %p149
      %p151 = scmp.ne.s32.totalorder %s139, %s140
      %p152 = scmp.eq.s32.totalorder %s25, 1
      %p153 = por %p151, %p152
      %p155 = scmp.ne.s32.totalorder %s140, %s154
      %p156 = scmp.eq.s32.totalorder %s25, 0
      %p157 = por %p155, %p156
      %s159 = sadd.s32 %s158, 1
      %p162 = scmp.eq.s32.totalorder %s19, 1
      %p163 = scmp.ne.s32.totalorder %s158, %s160
      %p164 = scmp.eq.s32.totalorder %s19, 0
      %p165 = por %p163, %p164
      %p166 = scmp.ne.s32.totalorder %s158, %s160
      %p167 = scmp.eq.s32.totalorder %s24, 1
      %p168 = por %p166, %p167
      %p169 = scmp.ne.s32.totalorder %s160, %s161
      %p170 = scmp.eq.s32.totalorder %s24, 0
      %p171 = por %p169, %p170
      %p172 = scmp.ne.s32.totalorder %s160, %s161
      %p173 = scmp.eq.s32.totalorder %s25, 1
      %p174 = por %p172, %p173
      %p176 = scmp.ne.s32.totalorder %s161, %s175
      %p177 = scmp.eq.s32.totalorder %s25, 0
      %p178 = por %p176, %p177
      %s179 = ssub.s32 %s19, %s26
      %p180 = scmp.eq.s32.totalorder %s179, 0
      %s182 = sadd.s32 %s181, 1
      %s183 = scalar_select %p180, %s181, %s182
      %p186 = pneg %p180
      %p187 = scmp.eq.s32.totalorder %s19, 1
      %p188 = por %p186, %p187
      %p189 = scmp.ne.s32.totalorder %s181, %s184
      %p190 = scmp.eq.s32.totalorder %s19, 0
      %p191 = por %p189, %p190
      %p192 = scmp.ne.s32.totalorder %s181, %s184
      %p193 = scmp.eq.s32.totalorder %s24, 1
      %p194 = por %p192, %p193
      %p195 = scmp.ne.s32.totalorder %s184, %s185
      %p196 = scmp.eq.s32.totalorder %s24, 0
      %p197 = por %p195, %p196
      %p198 = scmp.ne.s32.totalorder %s184, %s185
      %p199 = scmp.eq.s32.totalorder %s25, 1
      %p200 = por %p198, %p199
      %p202 = scmp.ne.s32.totalorder %s185, %s201
      %p203 = scmp.eq.s32.totalorder %s25, 0
      %p204 = por %p202, %p203
      %p205 = scmp.le.s32.totalorder 1, %s19
      %p206 = scmp.lt.s32.totalorder %s19, 3
      %p207 = pnand %p205, %p206
      %p208 = pneg %p207
      // Predicated region
      $region9: #{tpu_custom_call.1} parent=5 // pred_check
        _
      $region10: #{tpu_custom_call.1} parent=5 // pred_check_branch
        %210 = sbr.rel (%p207) target = $region12
      $region11: #{tpu_custom_call.1} parent=5 // pred_region
        %s211 = ssub.s32 %s19, 1
        // Predicated region
        $region13: #{tpu_custom_call.1} parent=11 // pred_check
          %p212 = pneg %p66
        $region14: #{tpu_custom_call.1} parent=11 // pred_check_branch
          %214 = sbr.rel (%p212) target = $region16
        $region15: #{tpu_custom_call.1} parent=11 // pred_region
          _
        $region16: #{tpu_custom_call.1} parent=11 // pred_fallthru
          _
        // Predicated region
        $region17: #{tpu_custom_call.1} parent=11 // pred_check
          %p215 = pneg %p87
        $region18: #{tpu_custom_call.1} parent=11 // pred_check_branch
          %217 = sbr.rel (%p215) target = $region20
        $region19: #{tpu_custom_call.1} parent=11 // pred_region
          _
        $region20: #{tpu_custom_call.1} parent=11 // pred_fallthru
          _
        // Predicated region
        $region21: #{tpu_custom_call.1} parent=11 // pred_check
          %p218 = pneg %p108
        $region22: #{tpu_custom_call.1} parent=11 // pred_check_branch
          %220 = sbr.rel (%p218) target = $region24
        $region23: #{tpu_custom_call.1} parent=11 // pred_region
          %222 = vsyncadd [#allocation5], 0
          %s224 = sshll.u32 %s3, 4
          %s225 = int_to_ptr.hbm [resolvable:$true] %s224
          %s226 = sshll.u32 [#allocation4], 4
          %s227 = int_to_ptr.vmem [resolvable:$true] %s226
          %229 = dma.hbm_to_vmem [thread:$0]  %s225, 256, %s227, [#allocation5]
        $region24: #{tpu_custom_call.1} parent=11 // pred_fallthru
          _
        // Predicated region
        $region25: #{tpu_custom_call.1} parent=11 // pred_check
          %p230 = pneg %p129
        $region26: #{tpu_custom_call.1} parent=11 // pred_check_branch
          %232 = sbr.rel (%p230) target = $region28
        $region27: #{tpu_custom_call.1} parent=11 // pred_region
          _
        $region28: #{tpu_custom_call.1} parent=11 // pred_fallthru
          _
        // Predicated region
        $region29: #{tpu_custom_call.1} parent=11 // pred_check
          %p233 = pneg %p150
        $region30: #{tpu_custom_call.1} parent=11 // pred_check_branch
          %235 = sbr.rel (%p233) target = $region32
        $region31: #{tpu_custom_call.1} parent=11 // pred_region
          _
        $region32: #{tpu_custom_call.1} parent=11 // pred_fallthru
          _
        // Predicated region
        $region33: #{tpu_custom_call.1} parent=11 // pred_check
          %p236 = pneg %p171
        $region34: #{tpu_custom_call.1} parent=11 // pred_check_branch
          %238 = sbr.rel (%p236) target = $region36
        $region35: #{tpu_custom_call.1} parent=11 // pred_region
          _
        $region36: #{tpu_custom_call.1} parent=11 // pred_fallthru
          _
      $region12: #{tpu_custom_call.1} parent=5 // pred_fallthru
        _
      %p239 = scmp.lt.s32.totalorder %s19, 2
      // Predicated region
      $region37: #{tpu_custom_call.1} parent=5 // pred_check
        %p240 = pneg %p239
      $region38: #{tpu_custom_call.1} parent=5 // pred_check_branch
        %242 = sbr.rel (%p240) target = $region40
      $region39: #{tpu_custom_call.1} parent=5 // pred_region
        // Predicated region
        $region41: #{tpu_custom_call.1} parent=39 // pred_check
          %p243 = pneg %p39
        $region42: #{tpu_custom_call.1} parent=39 // pred_check_branch
          %245 = sbr.rel (%p243) target = $region44
        $region43: #{tpu_custom_call.1} parent=39 // pred_region
          %p246 = scmp.lt.s32.totalorder %s19, 1
          %s247 = scalar_select %p246, %s19, 1
          %s248 = smul.addr %s247, 2
          %s249 = scalar_lea.vmem %s0, %s248
        $region44: #{tpu_custom_call.1} parent=39 // pred_fallthru
          _
      $region40: #{tpu_custom_call.1} parent=5 // pred_fallthru
        _
      %p250 = scmp.le.s32.totalorder 1, %s19
      %p251 = scmp.lt.s32.totalorder %s19, 3
      %p252 = pnand %p250, %p251
      %p253 = pneg %p252
      // Predicated region
      $region45: #{tpu_custom_call.1} parent=5 // pred_check
        _
      $region46: #{tpu_custom_call.1} parent=5 // pred_check_branch
        %255 = sbr.rel (%p252) target = $region48
      $region47: #{tpu_custom_call.1} parent=5 // pred_region
        %s256 = ssub.s32 %s19, 1
        // Predicated region
        $region49: #{tpu_custom_call.1} parent=47 // pred_check
          %p257 = pneg %p108
        $region50: #{tpu_custom_call.1} parent=47 // pred_check_branch
          %259 = sbr.rel (%p257) target = $region52
        $region51: #{tpu_custom_call.1} parent=47 // pred_region
          %261 = dma.done [#allocation5], 256
        $region52: #{tpu_custom_call.1} parent=47 // pred_fallthru
          _
        %p262 = scmp.lt.s32.totalorder %s24, 1
        %s263 = scalar_select %p262, %s24, 1
        %s264 = smul.addr %s263, 2
        %s265 = scalar_lea.vmem %s0, %s264
        %p266 = pneg %p45
        %p267 = pneg %p42
        %p268 = pneg %p66
        %p269 = pneg %p63
        %p270 = pneg %p87
        %p271 = pneg %p84
        %p272 = pneg %p108
        %p273 = pneg %p105
        %p274 = pneg %p129
        %p275 = pneg %p126
        %p276 = pneg %p150
        %p277 = pneg %p147
        %p278 = pneg %p171
        %p279 = pneg %p168
        %p280 = pneg %p197
        %p281 = pneg %p194
        %s282 = sand.u32 %s184, 1
        %s283 = scalar_lea.sflag [#allocation6], %s282
        %s284 = sand.u32 %s184, 1
        %s285 = smul.addr %s284, 2
        %s286 = scalar_lea.vmem [#allocation7], %s285
        %p287 = scmp.lt.s32.totalorder %s24, 1
        %s288 = scalar_select %p287, %s24, 1
        %s289 = smul.addr %s288, 2
        %s290 = scalar_lea.vmem %s0, %s289
        %v291 = vld [vmem:[%s290] sm:$0x3]
        %v292 = vlaneseq
        %v293 = vand.u32 %v292, 127
        %v294 = vadd.s32 %v293, 128
        %vm295 = vcmp.lt.s32.totalorder %v293, 0
        %v296 = vsub.s32 0, %v293
        %v297 = vsel %vm295, %v296, %v293
        %v298 = vshrl.u32 %v297, 4
        %v299 = vand.u32 %v297, 15
        %v300 = vsub.s32 0, %v299
        %v301 = vsel %vm295, %v300, %v299
        %vm302 = vcmp.lt.s32.totalorder %v294, 0
        %v303 = vsub.s32 0, %v294
        %v304 = vsel %vm302, %v303, %v294
        %v305 = vshrl.u32 %v304, 4
        %v306 = vand.u32 %v304, 15
        %v307 = vsub.s32 0, %v306
        %v308 = vsel %vm302, %v307, %v306
        %vm309 = vcmp.ne.s32.totalorder %v301, 0
        %vm310 = vcmp.ne.s32.totalorder %v308, 0
        %vm311 = vcmp.lt.s32.totalorder %v301, 0
        %vm312 = vcmp.lt.s32.totalorder %v308, 0
        %vm313 = vmand %vm311, %vm309
        %vm314 = vmand %vm312, %vm310
        %v315 = vadd.s32 %v301, 16
        %v316 = vadd.s32 %v308, 16
        %v317 = vsel %vm313, %v315, %v301
        %v318 = vsel %vm314, %v316, %v308
        %vm319 = vcmp.lt.s32.totalorder %v317, 1
        %vm320 = vcmp.lt.s32.totalorder %v318, 1
        %vm321 = vcmp.ge.s32.totalorder %v317, 15
        %vm322 = vcmp.ge.s32.totalorder %v318, 15
        %v323 = vlaneseq
        %vm324 = vcmp.ge.s32.totalorder %v323, 0
        %vm325 = vcmp.lt.s32.totalorder %v323, 256
        %vm326 = vmand %vm324, %vm325
        %327 = vst.msk [vmem:[#allocation2] ss:$8 sm:$0x3] %vm326, %v291
        %328 = vst.msk [vmem:[#allocation2] ss:$8 sm:$0x0] %vm326, %v291
        %s329 = scalar_lea.vmem [#allocation2], 16
        %330 = vst.msk [vmem:[%s329] ss:$8 sm:$0x3] %vm326, %v291
        %331 = vst.msk [vmem:[%s329] ss:$8 sm:$0x0] %vm326, %v291
        %s332 = scalar_lea.vmem [#allocation2], 32
        %333 = vst.msk [vmem:[%s332] ss:$8 sm:$0x3] %vm326, %v291
        %334 = vst.msk [vmem:[%s332] ss:$8 sm:$0x0] %vm326, %v291
        %s335 = scalar_lea.vmem [#allocation2], 8
        %v336 = vld [vmem:[%s335] ss:$8 sm:$0x7]
        %v338 = vperm.slane %v336, 0
        %v339 = vperm.slane %v336, 1
        %v340 = vperm.slane %v336, 2
        %341 = vrot.lane.b32.xlu0 %v338, 1
        %v342 = vpop.permute.xlu0 %341
        %343 = vrot.lane.b32.xlu0 %v339, 1
        %v344 = vpop.permute.xlu0 %343
        %345 = vrot.lane.b32.xlu0 %v340, 1
        %v346 = vpop.permute.xlu0 %345
        %vm347 = vcmask 7168
        %v348 = vsel %vm347, %v342, %v344
        %v349 = vsel %vm347, %v344, %v346
        %352 = vrot.lane.b32.xlu0 %v338, 17
        %v353 = vpop.permute.xlu0 %352
        %354 = vrot.lane.b32.xlu0 %v339, 17
        %v355 = vpop.permute.xlu0 %354
        %356 = vrot.lane.b32.xlu0 %v340, 17
        %v357 = vpop.permute.xlu0 %356
        %vm358 = vcmask 138240
        %v359 = vsel %vm358, %v353, %v355
        %v360 = vsel %vm358, %v355, %v357
        %v363 = vsel %vm319, %v348, %v359
        %v364 = vsel %vm320, %v349, %v360
        %365 = vrot.lane.b32.xlu0 %v338, 31
        %v366 = vpop.permute.xlu0 %365
        %367 = vrot.lane.b32.xlu0 %v339, 31
        %v368 = vpop.permute.xlu0 %367
        %369 = vrot.lane.b32.xlu0 %v340, 31
        %v370 = vpop.permute.xlu0 %369
        %vm371 = vcmask 252928
        %v372 = vsel %vm371, %v366, %v368
        %v373 = vsel %vm371, %v368, %v370
        %376 = vrot.lane.b32.xlu0 %v338, 15
        %v377 = vpop.permute.xlu0 %376
        %378 = vrot.lane.b32.xlu0 %v339, 15
        %v379 = vpop.permute.xlu0 %378
        %380 = vrot.lane.b32.xlu0 %v340, 15
        %v381 = vpop.permute.xlu0 %380
        %vm382 = vcmask 121856
        %v383 = vsel %vm382, %v377, %v379
        %v384 = vsel %vm382, %v379, %v381
        %v387 = vsel %vm321, %v372, %v383
        %v388 = vsel %vm322, %v373, %v384
        %v389 = vld [vmem:[%s329] ss:$8 sm:$0x7]
        %v391 = vperm.slane %v389, 0
        %v392 = vperm.slane %v389, 1
        %v393 = vperm.slane %v389, 2
        %394 = vrot.lane.b32.xlu0 %v391, 113
        %v395 = vpop.permute.xlu0 %394
        %396 = vrot.lane.b32.xlu0 %v392, 113
        %v397 = vpop.permute.xlu0 %396
        %398 = vrot.lane.b32.xlu0 %v393, 113
        %v399 = vpop.permute.xlu0 %398
        %vm400 = vcmask 924672
        %v401 = vsel %vm400, %v395, %v397
        %v402 = vsel %vm400, %v397, %v399
        %v405 = vsel %vm319, %v401, %v348
        %v406 = vsel %vm320, %v402, %v349
        %v407 = vld [vmem:[%s329] ss:$8 sm:$0x3]
        %408 = vrot.lane.b32.xlu0 %v391, 127
        %v409 = vpop.permute.xlu0 %408
        %410 = vrot.lane.b32.xlu0 %v392, 127
        %v411 = vpop.permute.xlu0 %410
        %412 = vrot.lane.b32.xlu0 %v393, 127
        %v413 = vpop.permute.xlu0 %412
        %vm414 = vcmask 1039360
        %v415 = vsel %vm414, %v409, %v411
        %v416 = vsel %vm414, %v411, %v413
        %v419 = vsel %vm321, %v383, %v415
        %v420 = vsel %vm322, %v384, %v416
        %421 = vrot.lane.b32.xlu0 %v391, 97
        %v422 = vpop.permute.xlu0 %421
        %423 = vrot.lane.b32.xlu0 %v392, 97
        %v424 = vpop.permute.xlu0 %423
        %425 = vrot.lane.b32.xlu0 %v393, 97
        %v426 = vpop.permute.xlu0 %425
        %vm427 = vcmask 793600
        %v428 = vsel %vm427, %v422, %v424
        %v429 = vsel %vm427, %v424, %v426
        %v432 = vsel %vm319, %v428, %v401
        %v433 = vsel %vm320, %v429, %v402
        %434 = vrot.lane.b32.xlu0 %v391, 111
        %v435 = vpop.permute.xlu0 %434
        %436 = vrot.lane.b32.xlu0 %v392, 111
        %v437 = vpop.permute.xlu0 %436
        %438 = vrot.lane.b32.xlu0 %v393, 111
        %v439 = vpop.permute.xlu0 %438
        %vm440 = vcmask 908288
        %v441 = vsel %vm440, %v435, %v437
        %v442 = vsel %vm440, %v437, %v439
        %v445 = vsel %vm321, %v415, %v441
        %v446 = vsel %vm322, %v416, %v442
        %v447 = vld [vmem:[%s1] sm:$0xff]
        %v448 = vld [vmem:[%s1 + $0x8] sm:$0xff]
        %450 = vset.pattern.permute.xlu0 0
        %451 = vperm.xlu0 %450, %v447
        %v452 = vpop.permute.xlu0 %451
        %455 = vset.pattern.permute.xlu0 0
        %456 = vperm.xlu0 %455, %v448
        %v457 = vpop.permute.xlu0 %456
        %v459 = vperm.slane %v363, 0
        %v460 = vperm.slane %v364, 0
        %v461 = vmul.f32 %v452, %v459
        %v462 = vmul.f32 %v452, %v460
        %v463 = vmul.f32 %v457, %v459
        %v464 = vmul.f32 %v457, %v460
        %v465 = vadd.f32 %v461, 0.0
        %v466 = vadd.f32 %v462, 0.0
        %v467 = vadd.f32 %v463, 0.0
        %v468 = vadd.f32 %v464, 0.0
        %469 = vset.pattern.permute.xlu0 1
        %470 = vperm.xlu0 %469, %v447
        %v471 = vpop.permute.xlu0 %470
        %473 = vset.pattern.permute.xlu0 1
        %474 = vperm.xlu0 %473, %v448
        %v475 = vpop.permute.xlu0 %474
        %v480 = vmul.f32 %v471, %v338
        %v481 = vmul.f32 %v471, %v339
        %v482 = vmul.f32 %v471, %v340
        %v483 = vmul.f32 %v475, %v338
        %v484 = vmul.f32 %v475, %v339
        %v485 = vmul.f32 %v475, %v340
        %492 = vrot.lane.b32.xlu0 %v480, 16
        %v493 = vpop.permute.xlu0 %492
        %494 = vrot.lane.b32.xlu0 %v481, 16
        %v495 = vpop.permute.xlu0 %494
        %496 = vrot.lane.b32.xlu0 %v482, 16
        %v497 = vpop.permute.xlu0 %496
        %498 = vrot.lane.b32.xlu0 %v483, 16
        %v499 = vpop.permute.xlu0 %498
        %500 = vrot.lane.b32.xlu0 %v484, 16
        %v501 = vpop.permute.xlu0 %500
        %502 = vrot.lane.b32.xlu0 %v485, 16
        %v503 = vpop.permute.xlu0 %502
        %vm504 = vcmask 130048
        %v505 = vsel %vm504, %v493, %v495
        %v506 = vsel %vm504, %v495, %v497
        %v507 = vsel %vm504, %v499, %v501
        %v508 = vsel %vm504, %v501, %v503
        %v513 = vadd.f32 %v465, %v505
        %v514 = vadd.f32 %v466, %v506
        %v515 = vadd.f32 %v467, %v507
        %v516 = vadd.f32 %v468, %v508
        %517 = vset.pattern.permute.xlu0 2
        %518 = vperm.xlu0 %517, %v447
        %v519 = vpop.permute.xlu0 %518
        %521 = vset.pattern.permute.xlu0 2
        %522 = vperm.xlu0 %521, %v448
        %v523 = vpop.permute.xlu0 %522
        %v525 = vperm.slane %v387, 0
        %v526 = vperm.slane %v388, 0
        %v527 = vmul.f32 %v519, %v525
        %v528 = vmul.f32 %v519, %v526
        %v529 = vmul.f32 %v523, %v525
        %v530 = vmul.f32 %v523, %v526
        %v531 = vadd.f32 %v513, %v527
        %v532 = vadd.f32 %v514, %v528
        %v533 = vadd.f32 %v515, %v529
        %v534 = vadd.f32 %v516, %v530
        %535 = vset.pattern.permute.xlu0 3
        %536 = vperm.xlu0 %535, %v447
        %v537 = vpop.permute.xlu0 %536
        %539 = vset.pattern.permute.xlu0 3
        %540 = vperm.xlu0 %539, %v448
        %v541 = vpop.permute.xlu0 %540
        %v543 = vperm.slane %v405, 0
        %v544 = vperm.slane %v406, 0
        %v545 = vmul.f32 %v537, %v543
        %v546 = vmul.f32 %v537, %v544
        %v547 = vmul.f32 %v541, %v543
        %v548 = vmul.f32 %v541, %v544
        %v549 = vadd.f32 %v531, %v545
        %v550 = vadd.f32 %v532, %v546
        %v551 = vadd.f32 %v533, %v547
        %v552 = vadd.f32 %v534, %v548
        %553 = vset.pattern.permute.xlu0 4
        %554 = vperm.xlu0 %553, %v447
        %v555 = vpop.permute.xlu0 %554
        %557 = vset.pattern.permute.xlu0 4
        %558 = vperm.xlu0 %557, %v448
        %v559 = vpop.permute.xlu0 %558
        %v562 = vperm.slane %v407, 0
        %v563 = vperm.slane %v407, 1
        %v566 = vmul.f32 %v555, %v562
        %v567 = vmul.f32 %v555, %v563
        %v568 = vmul.f32 %v559, %v562
        %v569 = vmul.f32 %v559, %v563
        %v570 = vadd.f32 %v549, %v566
        %v571 = vadd.f32 %v550, %v567
        %v572 = vadd.f32 %v551, %v568
        %v573 = vadd.f32 %v552, %v569
        %574 = vset.pattern.permute.xlu0 5
        %575 = vperm.xlu0 %574, %v447
        %v576 = vpop.permute.xlu0 %575
        %578 = vset.pattern.permute.xlu0 5
        %579 = vperm.xlu0 %578, %v448
        %v580 = vpop.permute.xlu0 %579
        %v582 = vperm.slane %v419, 0
        %v583 = vperm.slane %v420, 0
        %v584 = vmul.f32 %v576, %v582
        %v585 = vmul.f32 %v576, %v583
        %v586 = vmul.f32 %v580, %v582
        %v587 = vmul.f32 %v580, %v583
        %v588 = vadd.f32 %v570, %v584
        %v589 = vadd.f32 %v571, %v585
        %v590 = vadd.f32 %v572, %v586
        %v591 = vadd.f32 %v573, %v587
        %592 = vset.pattern.permute.xlu0 6
        %593 = vperm.xlu0 %592, %v447
        %v594 = vpop.permute.xlu0 %593
        %596 = vset.pattern.permute.xlu0 6
        %597 = vperm.xlu0 %596, %v448
        %v598 = vpop.permute.xlu0 %597
        %v600 = vperm.slane %v432, 0
        %v601 = vperm.slane %v433, 0
        %v602 = vmul.f32 %v594, %v600
        %v603 = vmul.f32 %v594, %v601
        %v604 = vmul.f32 %v598, %v600
        %v605 = vmul.f32 %v598, %v601
        %v606 = vadd.f32 %v588, %v602
        %v607 = vadd.f32 %v589, %v603
        %v608 = vadd.f32 %v590, %v604
        %v609 = vadd.f32 %v591, %v605
        %610 = vset.pattern.permute.xlu0 7
        %611 = vperm.xlu0 %610, %v447
        %v612 = vpop.permute.xlu0 %611
        %614 = vset.pattern.permute.xlu0 7
        %615 = vperm.xlu0 %614, %v448
        %v616 = vpop.permute.xlu0 %615
        %v621 = vmul.f32 %v612, %v391
        %v622 = vmul.f32 %v612, %v392
        %v623 = vmul.f32 %v612, %v393
        %v624 = vmul.f32 %v616, %v391
        %v625 = vmul.f32 %v616, %v392
        %v626 = vmul.f32 %v616, %v393
        %633 = vrot.lane.b32.xlu0 %v621, 112
        %v634 = vpop.permute.xlu0 %633
        %635 = vrot.lane.b32.xlu0 %v622, 112
        %v636 = vpop.permute.xlu0 %635
        %637 = vrot.lane.b32.xlu0 %v623, 112
        %v638 = vpop.permute.xlu0 %637
        %639 = vrot.lane.b32.xlu0 %v624, 112
        %v640 = vpop.permute.xlu0 %639
        %641 = vrot.lane.b32.xlu0 %v625, 112
        %v642 = vpop.permute.xlu0 %641
        %643 = vrot.lane.b32.xlu0 %v626, 112
        %v644 = vpop.permute.xlu0 %643
        %vm645 = vcmask 916480
        %v646 = vsel %vm645, %v634, %v636
        %v647 = vsel %vm645, %v636, %v638
        %v648 = vsel %vm645, %v640, %v642
        %v649 = vsel %vm645, %v642, %v644
        %v654 = vadd.f32 %v606, %v646
        %v655 = vadd.f32 %v607, %v647
        %v656 = vadd.f32 %v608, %v648
        %v657 = vadd.f32 %v609, %v649
        %658 = vset.pattern.permute.xlu0 8
        %659 = vperm.xlu0 %658, %v447
        %v660 = vpop.permute.xlu0 %659
        %662 = vset.pattern.permute.xlu0 8
        %663 = vperm.xlu0 %662, %v448
        %v664 = vpop.permute.xlu0 %663
        %v666 = vperm.slane %v445, 0
        %v667 = vperm.slane %v446, 0
        %v668 = vmul.f32 %v660, %v666
        %v669 = vmul.f32 %v660, %v667
        %v670 = vmul.f32 %v664, %v666
        %v671 = vmul.f32 %v664, %v667
        %v672 = vadd.f32 %v654, %v668
        %v673 = vadd.f32 %v655, %v669
        %v674 = vadd.f32 %v656, %v670
        %v675 = vadd.f32 %v657, %v671
        %v676 = vld [vmem:[%s2] sm:$0xff]
        %v677 = vld [vmem:[%s2 + $0x8] sm:$0xff]
        %679 = vset.pattern.permute.xlu0 0
        %680 = vperm.xlu0 %679, %v676
        %v681 = vpop.permute.xlu0 %680
        %684 = vset.pattern.permute.xlu0 0
        %685 = vperm.xlu0 %684, %v677
        %v686 = vpop.permute.xlu0 %685
        %v688 = vadd.f32 %v672, %v681
        %v689 = vadd.f32 %v673, %v681
        %v690 = vadd.f32 %v674, %v686
        %v691 = vadd.f32 %v675, %v686
        %v692 = vmax.f32 %v688, 0.0
        %v693 = vmax.f32 %v689, 0.0
        %v694 = vmax.f32 %v690, 0.0
        %v695 = vmax.f32 %v691, 0.0
        %696 = vst [vmem:[#allocation2] sm:$0xff] %v692
        %697 = vst [vmem:[#allocation2 + $0x8] sm:$0xff] %v693
        %698 = vst [vmem:[#allocation2 + $0x30] sm:$0xff] %v694
        %699 = vst [vmem:[#allocation2 + $0x38] sm:$0xff] %v695
        %700 = vst [vmem:[#allocation2 + $0x10] sm:$0xff] %v692
        %701 = vst [vmem:[#allocation2 + $0x18] sm:$0xff] %v693
        %702 = vst [vmem:[#allocation2 + $0x40] sm:$0xff] %v694
        %703 = vst [vmem:[#allocation2 + $0x48] sm:$0xff] %v695
        %704 = vst [vmem:[#allocation2 + $0x20] sm:$0xff] %v692
        %705 = vst [vmem:[#allocation2 + $0x28] sm:$0xff] %v693
        %706 = vst [vmem:[#allocation2 + $0x50] sm:$0xff] %v694
        %707 = vst [vmem:[#allocation2 + $0x58] sm:$0xff] %v695
        %v708 = vld [vmem:[#allocation2 + $0x8] sm:$0xff]
        %v709 = vld [vmem:[#allocation2 + $0x10] sm:$0xff]
        %v710 = vld [vmem:[#allocation2 + $0x18] sm:$0xff]
        %v711 = vld [vmem:[#allocation2 + $0x38] sm:$0xff]
        %v712 = vld [vmem:[#allocation2 + $0x40] sm:$0xff]
        %v713 = vld [vmem:[#allocation2 + $0x48] sm:$0xff]
        %720 = vrot.lane.b32.xlu0 %v708, 1
        %v721 = vpop.permute.xlu0 %720
        %722 = vrot.lane.b32.xlu0 %v709, 1
        %v723 = vpop.permute.xlu0 %722
        %724 = vrot.lane.b32.xlu0 %v710, 1
        %v725 = vpop.permute.xlu0 %724
        %726 = vrot.lane.b32.xlu0 %v711, 1
        %v727 = vpop.permute.xlu0 %726
        %728 = vrot.lane.b32.xlu0 %v712, 1
        %v729 = vpop.permute.xlu0 %728
        %730 = vrot.lane.b32.xlu0 %v713, 1
        %v731 = vpop.permute.xlu0 %730
        %v732 = vsel %vm347, %v721, %v723
        %v733 = vsel %vm347, %v723, %v725
        %v734 = vsel %vm347, %v727, %v729
        %v735 = vsel %vm347, %v729, %v731
        %740 = vrot.lane.b32.xlu0 %v708, 17
        %v741 = vpop.permute.xlu0 %740
        %742 = vrot.lane.b32.xlu0 %v709, 17
        %v743 = vpop.permute.xlu0 %742
        %744 = vrot.lane.b32.xlu0 %v710, 17
        %v745 = vpop.permute.xlu0 %744
        %746 = vrot.lane.b32.xlu0 %v711, 17
        %v747 = vpop.permute.xlu0 %746
        %748 = vrot.lane.b32.xlu0 %v712, 17
        %v749 = vpop.permute.xlu0 %748
        %750 = vrot.lane.b32.xlu0 %v713, 17
        %v751 = vpop.permute.xlu0 %750
        %v752 = vsel %vm358, %v741, %v743
        %v753 = vsel %vm358, %v743, %v745
        %v754 = vsel %vm358, %v747, %v749
        %v755 = vsel %vm358, %v749, %v751
        %v760 = vsel %vm319, %v732, %v752
        %v761 = vsel %vm320, %v733, %v753
        %v762 = vsel %vm319, %v734, %v754
        %v763 = vsel %vm320, %v735, %v755
        %764 = vrot.lane.b32.xlu0 %v708, 31
        %v765 = vpop.permute.xlu0 %764
        %766 = vrot.lane.b32.xlu0 %v709, 31
        %v767 = vpop.permute.xlu0 %766
        %768 = vrot.lane.b32.xlu0 %v710, 31
        %v769 = vpop.permute.xlu0 %768
        %770 = vrot.lane.b32.xlu0 %v711, 31
        %v771 = vpop.permute.xlu0 %770
        %772 = vrot.lane.b32.xlu0 %v712, 31
        %v773 = vpop.permute.xlu0 %772
        %774 = vrot.lane.b32.xlu0 %v713, 31
        %v775 = vpop.permute.xlu0 %774
        %v776 = vsel %vm371, %v765, %v767
        %v777 = vsel %vm371, %v767, %v769
        %v778 = vsel %vm371, %v771, %v773
        %v779 = vsel %vm371, %v773, %v775
        %784 = vrot.lane.b32.xlu0 %v708, 15
        %v785 = vpop.permute.xlu0 %784
        %786 = vrot.lane.b32.xlu0 %v709, 15
        %v787 = vpop.permute.xlu0 %786
        %788 = vrot.lane.b32.xlu0 %v710, 15
        %v789 = vpop.permute.xlu0 %788
        %790 = vrot.lane.b32.xlu0 %v711, 15
        %v791 = vpop.permute.xlu0 %790
        %792 = vrot.lane.b32.xlu0 %v712, 15
        %v793 = vpop.permute.xlu0 %792
        %794 = vrot.lane.b32.xlu0 %v713, 15
        %v795 = vpop.permute.xlu0 %794
        %v796 = vsel %vm382, %v785, %v787
        %v797 = vsel %vm382, %v787, %v789
        %v798 = vsel %vm382, %v791, %v793
        %v799 = vsel %vm382, %v793, %v795
        %v804 = vsel %vm321, %v776, %v796
        %v805 = vsel %vm322, %v777, %v797
        %v806 = vsel %vm321, %v778, %v798
        %v807 = vsel %vm322, %v779, %v799
        %v808 = vld [vmem:[#allocation2 + $0x20] sm:$0xff]
        %v809 = vld [vmem:[#allocation2 + $0x50] sm:$0xff]
        %812 = vrot.lane.b32.xlu0 %v709, 113
        %v813 = vpop.permute.xlu0 %812
        %814 = vrot.lane.b32.xlu0 %v710, 113
        %v815 = vpop.permute.xlu0 %814
        %816 = vrot.lane.b32.xlu0 %v808, 113
        %v817 = vpop.permute.xlu0 %816
        %818 = vrot.lane.b32.xlu0 %v712, 113
        %v819 = vpop.permute.xlu0 %818
        %820 = vrot.lane.b32.xlu0 %v713, 113
        %v821 = vpop.permute.xlu0 %820
        %822 = vrot.lane.b32.xlu0 %v809, 113
        %v823 = vpop.permute.xlu0 %822
        %v824 = vsel %vm400, %v813, %v815
        %v825 = vsel %vm400, %v815, %v817
        %v826 = vsel %vm400, %v819, %v821
        %v827 = vsel %vm400, %v821, %v823
        %v832 = vsel %vm319, %v824, %v732
        %v833 = vsel %vm320, %v825, %v733
        %v834 = vsel %vm319, %v826, %v734
        %v835 = vsel %vm320, %v827, %v735
        %836 = vrot.lane.b32.xlu0 %v709, 127
        %v837 = vpop.permute.xlu0 %836
        %838 = vrot.lane.b32.xlu0 %v710, 127
        %v839 = vpop.permute.xlu0 %838
        %840 = vrot.lane.b32.xlu0 %v808, 127
        %v841 = vpop.permute.xlu0 %840
        %842 = vrot.lane.b32.xlu0 %v712, 127
        %v843 = vpop.permute.xlu0 %842
        %844 = vrot.lane.b32.xlu0 %v713, 127
        %v845 = vpop.permute.xlu0 %844
        %846 = vrot.lane.b32.xlu0 %v809, 127
        %v847 = vpop.permute.xlu0 %846
        %v848 = vsel %vm414, %v837, %v839
        %v849 = vsel %vm414, %v839, %v841
        %v850 = vsel %vm414, %v843, %v845
        %v851 = vsel %vm414, %v845, %v847
        %v856 = vsel %vm321, %v796, %v848
        %v857 = vsel %vm322, %v797, %v849
        %v858 = vsel %vm321, %v798, %v850
        %v859 = vsel %vm322, %v799, %v851
        %860 = vrot.lane.b32.xlu0 %v709, 97
        %v861 = vpop.permute.xlu0 %860
        %862 = vrot.lane.b32.xlu0 %v710, 97
        %v863 = vpop.permute.xlu0 %862
        %864 = vrot.lane.b32.xlu0 %v808, 97
        %v865 = vpop.permute.xlu0 %864
        %866 = vrot.lane.b32.xlu0 %v712, 97
        %v867 = vpop.permute.xlu0 %866
        %868 = vrot.lane.b32.xlu0 %v713, 97
        %v869 = vpop.permute.xlu0 %868
        %870 = vrot.lane.b32.xlu0 %v809, 97
        %v871 = vpop.permute.xlu0 %870
        %v872 = vsel %vm427, %v861, %v863
        %v873 = vsel %vm427, %v863, %v865
        %v874 = vsel %vm427, %v867, %v869
        %v875 = vsel %vm427, %v869, %v871
        %v880 = vsel %vm319, %v872, %v824
        %v881 = vsel %vm320, %v873, %v825
        %v882 = vsel %vm319, %v874, %v826
        %v883 = vsel %vm320, %v875, %v827
        %884 = vrot.lane.b32.xlu0 %v709, 111
        %v885 = vpop.permute.xlu0 %884
        %886 = vrot.lane.b32.xlu0 %v710, 111
        %v887 = vpop.permute.xlu0 %886
        %888 = vrot.lane.b32.xlu0 %v808, 111
        %v889 = vpop.permute.xlu0 %888
        %890 = vrot.lane.b32.xlu0 %v712, 111
        %v891 = vpop.permute.xlu0 %890
        %892 = vrot.lane.b32.xlu0 %v713, 111
        %v893 = vpop.permute.xlu0 %892
        %894 = vrot.lane.b32.xlu0 %v809, 111
        %v895 = vpop.permute.xlu0 %894
        %v896 = vsel %vm440, %v885, %v887
        %v897 = vsel %vm440, %v887, %v889
        %v898 = vsel %vm440, %v891, %v893
        %v899 = vsel %vm440, %v893, %v895
        %v904 = vsel %vm321, %v848, %v896
        %v905 = vsel %vm322, %v849, %v897
        %v906 = vsel %vm321, %v850, %v898
        %v907 = vsel %vm322, %v851, %v899
        %v908 = vld [vmem:[#allocation4] sm:$0xff]
        %v909 = vld [vmem:[#allocation4 + $0x8] sm:$0xff]
        %910 = vrot.lane.b32.xlu0 %v708, 16
        %v911 = vpop.permute.xlu0 %910
        %912 = vrot.lane.b32.xlu0 %v709, 16
        %v913 = vpop.permute.xlu0 %912
        %914 = vrot.lane.b32.xlu0 %v710, 16
        %v915 = vpop.permute.xlu0 %914
        %916 = vrot.lane.b32.xlu0 %v711, 16
        %v917 = vpop.permute.xlu0 %916
        %918 = vrot.lane.b32.xlu0 %v712, 16
        %v919 = vpop.permute.xlu0 %918
        %920 = vrot.lane.b32.xlu0 %v713, 16
        %v921 = vpop.permute.xlu0 %920
        %v922 = vsel %vm504, %v911, %v913
        %v923 = vsel %vm504, %v913, %v915
        %v924 = vsel %vm504, %v917, %v919
        %v925 = vsel %vm504, %v919, %v921
        %930 = vrot.lane.b32.xlu0 %v709, 112
        %v931 = vpop.permute.xlu0 %930
        %932 = vrot.lane.b32.xlu0 %v710, 112
        %v933 = vpop.permute.xlu0 %932
        %934 = vrot.lane.b32.xlu0 %v808, 112
        %v935 = vpop.permute.xlu0 %934
        %936 = vrot.lane.b32.xlu0 %v712, 112
        %v937 = vpop.permute.xlu0 %936
        %938 = vrot.lane.b32.xlu0 %v713, 112
        %v939 = vpop.permute.xlu0 %938
        %940 = vrot.lane.b32.xlu0 %v809, 112
        %v941 = vpop.permute.xlu0 %940
        %v942 = vsel %vm645, %v931, %v933
        %v943 = vsel %vm645, %v933, %v935
        %v944 = vsel %vm645, %v937, %v939
        %v945 = vsel %vm645, %v939, %v941
        %v950 = vld [vmem:[%s4] sm:$0xff]
        %952 = vset.pattern.permute.xlu0 0
        %953 = vperm.xlu0 %952, %v950
        %v954 = vpop.permute.xlu0 %953
        %v957 = vsel %vm504, %v909, 0
        %959 = vmatpush.msra.mxu0 %v944
        %960 = vmatpush.msra.mxu0 %v942
        %961 = vmatpush.msra.mxu0 %v882
        %962 = vmatpush.msra.mxu0 %v880
        %963 = vmatpush.msra.mxu0 %v858
        %964 = vmatpush.msra.mxu0 %v856
        %965 = vmatpush.msra.mxu0 %v712
        %966 = vmatpush.msra.mxu0 %v709
        %967 = vmatpush.msra.mxu0 %v834
        %968 = vmatpush.msra.mxu0 %v832
        %969 = vmatpush.msra.mxu0 %v806
        %970 = vmatpush.msra.mxu0 %v804
        %971 = vmatpush.msra.mxu0 %v924
        %972 = vmatpush.msra.mxu0 %v922
        %973 = vmatpush.msra.mxu0 %v762
        %974 = vmatpush.msra.mxu0 %v760
        %975 = vmatmul.f32.gmra.mxu0 %v908
        %v976 = vpop.f32.mrf.mxu0
        %v977 = vadd.f32 %v954, %v976
        %978 = vdwg.mxu0
        %979 = vmatpush.msra.mxu0 0.0
        %980 = vmatpush.msra.mxu0 0.0
        %981 = vmatpush.msra.mxu0 0.0
        %982 = vmatpush.msra.mxu0 0.0
        %983 = vmatpush.msra.mxu0 0.0
        %984 = vmatpush.msra.mxu0 0.0
        %985 = vmatpush.msra.mxu0 0.0
        %986 = vmatpush.msra.mxu0 0.0
        %987 = vmatpush.msra.mxu0 0.0
        %988 = vmatpush.msra.mxu0 0.0
        %989 = vmatpush.msra.mxu0 0.0
        %990 = vmatpush.msra.mxu0 0.0
        %991 = vmatpush.msra.mxu0 0.0
        %992 = vmatpush.msra.mxu0 0.0
        %993 = vmatpush.msra.mxu0 %v906
        %994 = vmatpush.msra.mxu0 %v904
        %995 = vmatmul.f32.gmra.mxu0 %v957
        %v996 = vpop.f32.mrf.mxu0
        %v997 = vadd.f32 %v977, %v996
        %998 = vdwg.mxu0
        %999 = vmatpush.msra.mxu0 %v945
        %1000 = vmatpush.msra.mxu0 %v943
        %1001 = vmatpush.msra.mxu0 %v883
        %1002 = vmatpush.msra.mxu0 %v881
        %1003 = vmatpush.msra.mxu0 %v859
        %1004 = vmatpush.msra.mxu0 %v857
        %1005 = vmatpush.msra.mxu0 %v713
        %1006 = vmatpush.msra.mxu0 %v710
        %1007 = vmatpush.msra.mxu0 %v835
        %1008 = vmatpush.msra.mxu0 %v833
        %1009 = vmatpush.msra.mxu0 %v807
        %1010 = vmatpush.msra.mxu0 %v805
        %1011 = vmatpush.msra.mxu0 %v925
        %1012 = vmatpush.msra.mxu0 %v923
        %1013 = vmatpush.msra.mxu0 %v763
        %1014 = vmatpush.msra.mxu0 %v761
        %1015 = vmatmul.f32.gmra.mxu0 %v908
        %v1016 = vpop.f32.mrf.mxu0
        %v1017 = vadd.f32 %v954, %v1016
        %1018 = vdwg.mxu0
        %1019 = vmatpush.msra.mxu0 0.0
        %1020 = vmatpush.msra.mxu0 0.0
        %1021 = vmatpush.msra.mxu0 0.0
        %1022 = vmatpush.msra.mxu0 0.0
        %1023 = vmatpush.msra.mxu0 0.0
        %1024 = vmatpush.msra.mxu0 0.0
        %1025 = vmatpush.msra.mxu0 0.0
        %1026 = vmatpush.msra.mxu0 0.0
        %1027 = vmatpush.msra.mxu0 0.0
        %1028 = vmatpush.msra.mxu0 0.0
        %1029 = vmatpush.msra.mxu0 0.0
        %1030 = vmatpush.msra.mxu0 0.0
        %1031 = vmatpush.msra.mxu0 0.0
        %1032 = vmatpush.msra.mxu0 0.0
        %1033 = vmatpush.msra.mxu0 %v907
        %1034 = vmatpush.msra.mxu0 %v905
        %1035 = vmatmul.f32.gmra.mxu0 %v957
        %v1036 = vpop.f32.mrf.mxu0
        %v1037 = vadd.f32 %v1017, %v1036
        %1038 = vdwg.mxu0
        %v1039 = vmax.f32 %v997, 0.0
        %v1040 = vmax.f32 %v1037, 0.0
        %1041 = vst [vmem:[#allocation2] sm:$0xff] %v1039
        %1042 = vst [vmem:[#allocation2 + $0x8] sm:$0xff] %v1040
        %1043 = vst [vmem:[#allocation2 + $0x10] sm:$0xff] %v1039
        %1044 = vst [vmem:[#allocation2 + $0x18] sm:$0xff] %v1040
        %1045 = vst [vmem:[#allocation2 + $0x20] sm:$0xff] %v1039
        %1046 = vst [vmem:[#allocation2 + $0x28] sm:$0xff] %v1040
        %v1047 = vld [vmem:[#allocation2 + $0x8] sm:$0xff]
        %v1048 = vld [vmem:[#allocation2 + $0x10] sm:$0xff]
        %v1049 = vld [vmem:[#allocation2 + $0x18] sm:$0xff]
        %1053 = vrot.lane.b32.xlu0 %v1047, 1
        %v1054 = vpop.permute.xlu0 %1053
        %1055 = vrot.lane.b32.xlu0 %v1048, 1
        %v1056 = vpop.permute.xlu0 %1055
        %1057 = vrot.lane.b32.xlu0 %v1049, 1
        %v1058 = vpop.permute.xlu0 %1057
        %v1059 = vsel %vm347, %v1054, %v1056
        %v1060 = vsel %vm347, %v1056, %v1058
        %1063 = vrot.lane.b32.xlu0 %v1047, 17
        %v1064 = vpop.permute.xlu0 %1063
        %1065 = vrot.lane.b32.xlu0 %v1048, 17
        %v1066 = vpop.permute.xlu0 %1065
        %1067 = vrot.lane.b32.xlu0 %v1049, 17
        %v1068 = vpop.permute.xlu0 %1067
        %v1069 = vsel %vm358, %v1064, %v1066
        %v1070 = vsel %vm358, %v1066, %v1068
        %v1073 = vsel %vm319, %v1059, %v1069
        %v1074 = vsel %vm320, %v1060, %v1070
        %1075 = vrot.lane.b32.xlu0 %v1047, 31
        %v1076 = vpop.permute.xlu0 %1075
        %1077 = vrot.lane.b32.xlu0 %v1048, 31
        %v1078 = vpop.permute.xlu0 %1077
        %1079 = vrot.lane.b32.xlu0 %v1049, 31
        %v1080 = vpop.permute.xlu0 %1079
        %v1081 = vsel %vm371, %v1076, %v1078
        %v1082 = vsel %vm371, %v1078, %v1080
        %1085 = vrot.lane.b32.xlu0 %v1047, 15
        %v1086 = vpop.permute.xlu0 %1085
        %1087 = vrot.lane.b32.xlu0 %v1048, 15
        %v1088 = vpop.permute.xlu0 %1087
        %1089 = vrot.lane.b32.xlu0 %v1049, 15
        %v1090 = vpop.permute.xlu0 %1089
        %v1091 = vsel %vm382, %v1086, %v1088
        %v1092 = vsel %vm382, %v1088, %v1090
        %v1095 = vsel %vm321, %v1081, %v1091
        %v1096 = vsel %vm322, %v1082, %v1092
        %v1097 = vld [vmem:[#allocation2 + $0x20] sm:$0xff]
        %1099 = vrot.lane.b32.xlu0 %v1048, 113
        %v1100 = vpop.permute.xlu0 %1099
        %1101 = vrot.lane.b32.xlu0 %v1049, 113
        %v1102 = vpop.permute.xlu0 %1101
        %1103 = vrot.lane.b32.xlu0 %v1097, 113
        %v1104 = vpop.permute.xlu0 %1103
        %v1105 = vsel %vm400, %v1100, %v1102
        %v1106 = vsel %vm400, %v1102, %v1104
        %v1109 = vsel %vm319, %v1105, %v1059
        %v1110 = vsel %vm320, %v1106, %v1060
        %1111 = vrot.lane.b32.xlu0 %v1048, 127
        %v1112 = vpop.permute.xlu0 %1111
        %1113 = vrot.lane.b32.xlu0 %v1049, 127
        %v1114 = vpop.permute.xlu0 %1113
        %1115 = vrot.lane.b32.xlu0 %v1097, 127
        %v1116 = vpop.permute.xlu0 %1115
        %v1117 = vsel %vm414, %v1112, %v1114
        %v1118 = vsel %vm414, %v1114, %v1116
        %v1121 = vsel %vm321, %v1091, %v1117
        %v1122 = vsel %vm322, %v1092, %v1118
        %1123 = vrot.lane.b32.xlu0 %v1048, 97
        %v1124 = vpop.permute.xlu0 %1123
        %1125 = vrot.lane.b32.xlu0 %v1049, 97
        %v1126 = vpop.permute.xlu0 %1125
        %1127 = vrot.lane.b32.xlu0 %v1097, 97
        %v1128 = vpop.permute.xlu0 %1127
        %v1129 = vsel %vm427, %v1124, %v1126
        %v1130 = vsel %vm427, %v1126, %v1128
        %v1133 = vsel %vm319, %v1129, %v1105
        %v1134 = vsel %vm320, %v1130, %v1106
        %1135 = vrot.lane.b32.xlu0 %v1048, 111
        %v1136 = vpop.permute.xlu0 %1135
        %1137 = vrot.lane.b32.xlu0 %v1049, 111
        %v1138 = vpop.permute.xlu0 %1137
        %1139 = vrot.lane.b32.xlu0 %v1097, 111
        %v1140 = vpop.permute.xlu0 %1139
        %v1141 = vsel %vm440, %v1136, %v1138
        %v1142 = vsel %vm440, %v1138, %v1140
        %v1145 = vsel %vm321, %v1117, %v1141
        %v1146 = vsel %vm322, %v1118, %v1142
        %v1147 = vld [vmem:[%s5] sm:$0x1]
        %1148 = vrot.lane.b32.xlu0 %v1047, 16
        %v1149 = vpop.permute.xlu0 %1148
        %1150 = vrot.lane.b32.xlu0 %v1048, 16
        %v1151 = vpop.permute.xlu0 %1150
        %1152 = vrot.lane.b32.xlu0 %v1049, 16
        %v1153 = vpop.permute.xlu0 %1152
        %v1154 = vsel %vm504, %v1149, %v1151
        %v1155 = vsel %vm504, %v1151, %v1153
        %1158 = vrot.lane.b32.xlu0 %v1048, 112
        %v1159 = vpop.permute.xlu0 %1158
        %1160 = vrot.lane.b32.xlu0 %v1049, 112
        %v1161 = vpop.permute.xlu0 %1160
        %1162 = vrot.lane.b32.xlu0 %v1097, 112
        %v1163 = vpop.permute.xlu0 %1162
        %v1164 = vsel %vm645, %v1159, %v1161
        %v1165 = vsel %vm645, %v1161, %v1163
        %v1168 = vld [vmem:[#allocation3] sm:$0x1]
        %1170 = vset.pattern.permute.xlu0 0
        %1171 = vperm.xlu0 %1170, %v1168
        %v1172 = vpop.permute.xlu0 %1171
        %v1174 = vperm.slane %v1172, 0
        %vm1175 = vcmask 588800
        %v1177 = vsel %vm1175, %v1147, 0
        %1179 = vmatpush.msra.mxu0 0.0
        %1180 = vmatpush.msra.mxu0 0.0
        %1181 = vmatpush.msra.mxu0 0.0
        %1182 = vmatpush.msra.mxu0 0.0
        %1183 = vmatpush.msra.mxu0 0.0
        %1184 = vmatpush.msra.mxu0 0.0
        %1185 = vmatpush.msra.mxu0 0.0
        %1186 = vmatpush.msra.mxu0 %v1145
        %1187 = vmatpush.msra.mxu0 %v1164
        %1188 = vmatpush.msra.mxu0 %v1133
        %1189 = vmatpush.msra.mxu0 %v1121
        %1190 = vmatpush.msra.mxu0 %v1048
        %1191 = vmatpush.msra.mxu0 %v1109
        %1192 = vmatpush.msra.mxu0 %v1095
        %1193 = vmatpush.msra.mxu0 %v1154
        %1194 = vmatpush.msra.mxu0 %v1073
        %1195 = vmatmul.f32.gmra.mxu0 %v1177
        %v1196 = vpop.f32.mrf.mxu0
        %v1197 = vadd.f32 %v1174, %v1196
        %1198 = vdwg.mxu0
        %1199 = vmatpush.msra.mxu0 0.0
        %1200 = vmatpush.msra.mxu0 0.0
        %1201 = vmatpush.msra.mxu0 0.0
        %1202 = vmatpush.msra.mxu0 0.0
        %1203 = vmatpush.msra.mxu0 0.0
        %1204 = vmatpush.msra.mxu0 0.0
        %1205 = vmatpush.msra.mxu0 0.0
        %1206 = vmatpush.msra.mxu0 %v1146
        %1207 = vmatpush.msra.mxu0 %v1165
        %1208 = vmatpush.msra.mxu0 %v1134
        %1209 = vmatpush.msra.mxu0 %v1122
        %1210 = vmatpush.msra.mxu0 %v1049
        %1211 = vmatpush.msra.mxu0 %v1110
        %1212 = vmatpush.msra.mxu0 %v1096
        %1213 = vmatpush.msra.mxu0 %v1155
        %1214 = vmatpush.msra.mxu0 %v1074
        %1215 = vmatmul.f32.gmra.mxu0 %v1177
        %v1216 = vpop.f32.mrf.mxu0
        %v1217 = vadd.f32 %v1174, %v1216
        %1218 = vdwg.mxu0
        %v1221 = vrot.slane %v1217, 7
        %vm1222 = vcmask 1040384
        %v1223 = vsel %vm1222, %v1197, %v1221
        %1225 = vst.msk [vmem:[%s286] sm:$0x3] %vm326, %v1223
        %s1226 = sand.u32 %s184, 1
        %s1227 = scalar_lea.sflag [#allocation6], %s1226
        %s1228 = sand.u32 %s184, 1
        %s1229 = smul.addr %s1228, 2
        %s1230 = scalar_lea.vmem [#allocation7], %s1229
        // Predicated region
        $region53: #{tpu_custom_call.1} parent=47 // pred_check
          %p1231 = pneg %p194
        $region54: #{tpu_custom_call.1} parent=47 // pred_check_branch
          %1233 = sbr.rel (%p1231) target = $region56
        $region55: #{tpu_custom_call.1} parent=47 // pred_region
          %1235 = vsyncadd %s1227, 0
          %s1236 = smul.addr %s24, 2
          %s1237 = scalar_lea.hbm %s7, %s1236
          %s1239 = sshll.u32 %s1230, 4
          %s1240 = int_to_ptr.vmem [resolvable:$true] %s1239
          %s1241 = sshll.u32 %s1237, 4
          %s1242 = int_to_ptr.hbm [resolvable:$true] %s1241
          %1244 = dma.vmem_to_hbm [thread:$0]  %s1240, 32, %s1242, %s1227
        $region56: #{tpu_custom_call.1} parent=47 // pred_fallthru
          _
      $region48: #{tpu_custom_call.1} parent=5 // pred_fallthru
        _
      %p1245 = scmp.le.s32.totalorder 2, %s19
      // Predicated region
      $region57: #{tpu_custom_call.1} parent=5 // pred_check
        %p1246 = pneg %p1245
      $region58: #{tpu_custom_call.1} parent=5 // pred_check_branch
        %1248 = sbr.rel (%p1246) target = $region60
      $region59: #{tpu_custom_call.1} parent=5 // pred_region
        %s1249 = ssub.s32 %s19, 2
        // Predicated region
        $region61: #{tpu_custom_call.1} parent=59 // pred_check
          %p1250 = pneg %p200
        $region62: #{tpu_custom_call.1} parent=59 // pred_check_branch
          %1252 = sbr.rel (%p1250) target = $region64
        $region63: #{tpu_custom_call.1} parent=59 // pred_region
          %s1253 = sand.u32 %s185, 1
          %s1254 = scalar_lea.sflag [#allocation6], %s1253
          %s1255 = sand.u32 %s185, 1
          %s1256 = smul.addr %s1255, 2
          %s1257 = scalar_lea.vmem [#allocation7], %s1256
          %1259 = dma.done %s1254, 32
        $region64: #{tpu_custom_call.1} parent=59 // pred_fallthru
          _
      $region60: #{tpu_custom_call.1} parent=5 // pred_fallthru
        _
    $region6: #{tpu_custom_call.1} parent=1 // loop_footer
      %s23 = sadd.s32 1, %s19
    $region7: #{tpu_custom_call.1} parent=1 // loop_footer_branch
      %18 = sbr.rel target = $region3
    $region8: #{tpu_custom_call.1} parent=1 // loop_exit
      _
    %1260 = vsyncpa [#allocation5], 1
    %s1261 = scalar_lea.sflag [#allocation5], 1
    %1262 = vsyncpa %s1261, 1
    %1263 = vsyncpa [#allocation6], 1
    %s1264 = scalar_lea.sflag [#allocation6], 1
    %1265 = vsyncpa %s1264, 1

</llo_original>
